<compile_context>
chip_gen: v7x
topology: tpu7x:2x2x1
jax: 0.10.0
libtpu: 0.0.40
codegen_flags: <defaults>
</compile_context>

<pallas_src>
import functools

import jax
import jax.numpy as jnp
from jax.experimental import pallas as pl
from jax.experimental.pallas import tpu as pltpu


def lstm_fc_kernel(x_ref, wih_ref, b_ref, whh_ref, wfc_ref, bfc_ref,
                   out_ref, gx_ref):
    """Fused input-projection + LSTM recurrence + final Linear.

    x_ref  : (T*Bp, E) f32   embedded inputs, time-major, batch padded to Bp
    wih_ref: (E, 4H)   bf16  input->gate weights (x @ W_ih layout)
    b_ref  : (1, 4H)   f32   b_ih + b_hh
    whh_ref: (H, 4H)   bf16  recurrent weights (h @ W_hh layout)
    wfc_ref: (H, O)    bf16  final linear weights
    bfc_ref: (1, O)    f32   final linear bias
    out_ref: (Bp, O)   f32
    gx_ref : (T*Bp, 4H) f32  VMEM scratch for the precomputed input gates
    """
    TB, _ = x_ref.shape
    H = whh_ref.shape[0]
    Bp = out_ref.shape[0]
    T = TB // Bp

    # --- Preamble: input projection for ALL timesteps as one MXU matmul. ---
    x_all = x_ref[...].astype(jnp.bfloat16)
    gx_ref[...] = (jnp.dot(x_all, wih_ref[...],
                           preferred_element_type=jnp.float32)
                   + b_ref[...])

    # --- Serial recurrence (T = 8, fully unrolled for LLO visibility). ---
    def step(t, carry):
        h, c = carry
        gx_t = gx_ref[pl.ds(t * Bp, Bp), :]                       # (Bp, 4H)
        # NOTE: read whh_ref inside the step (no vreg hoist) so Mosaic streams
        # the 128 KiB weight block from VMEM instead of spilling it.
        gates = gx_t + jnp.dot(h.astype(jnp.bfloat16), whh_ref[...],
                               preferred_element_type=jnp.float32)
        # PyTorch LSTM gate order: i, f, g, o  (each H=128 slice lane-aligned).
        i = jax.nn.sigmoid(gates[:, 0 * H:1 * H])
        f = jax.nn.sigmoid(gates[:, 1 * H:2 * H])
        g = jnp.tanh(gates[:, 2 * H:3 * H])
        o = jax.nn.sigmoid(gates[:, 3 * H:4 * H])
        c = f * c + i * g
        h = o * jnp.tanh(c)
        return (h, c)

    h0 = jnp.zeros((Bp, H), jnp.float32)
    c0 = jnp.zeros((Bp, H), jnp.float32)
    h, _ = jax.lax.fori_loop(0, T, step, (h0, c0), unroll=True)

    # --- Fused final Linear: h_T @ W_fc + b_fc  -> (Bp, O). ---
    out_ref[...] = (jnp.dot(h.astype(jnp.bfloat16), wfc_ref[...],
                            preferred_element_type=jnp.float32)
                    + bfc_ref[...]).astype(out_ref.dtype)
    # TODO(synk): per-chip option -- hold W_hh in MXU staging registers across
    # steps via pltpu.matmul_push_rhs/acc_lhs/pop (tile 128x128 on v5e,
    # 128x256 on v6e/v7x) to avoid re-streaming the RHS each step.


def chord_predictor_forward(tokens, params, *, chord_size, vocab_size):
    """tokens: int32 (B, T). Returns (B, chord_size, vocab_size) float32."""
    B, T = tokens.shape
    embed_w = params["embed"]            # (V, E) f32
    w_ih = params["w_ih_bf16"]           # (E, 4H) bf16
    w_hh = params["w_hh_bf16"]           # (H, 4H) bf16
    w_fc = params["w_fc_bf16"]           # (H, V*C) bf16
    b = params["b"]                      # (1, 4H) f32   (= b_ih + b_hh)
    b_fc = params["b_fc"]                # (1, V*C) f32

    E = embed_w.shape[1]
    H = w_hh.shape[0]
    out_dim = w_fc.shape[1]

    # Pad batch to the f32 sublane count so every vreg row and the (Bp, 512)
    # output store are dense.
    Bp = max(8, ((B + 7) // 8) * 8)

    # Pad the TOKENS (not the gates), gather directly in time-major padded
    # order, and flatten.  XLA fuses pad + transpose + gather + reshape into a
    # single tiny op; padded rows use token 0 (benign, sliced off below).
    tok_pad = jnp.pad(tokens, ((0, Bp - B), (0, 0)))         # (Bp, T)
    x_emb = jnp.take(embed_w, tok_pad.T, axis=0)             # (T, Bp, E)
    x_flat = x_emb.reshape(T * Bp, E)                        # (T*Bp, E)

    vmem = pl.BlockSpec(memory_space=pltpu.MemorySpace.VMEM)
    out = pl.pallas_call(
        lstm_fc_kernel,
        out_shape=jax.ShapeDtypeStruct((Bp, out_dim), jnp.float32),
        in_specs=[vmem] * 6,
        out_specs=vmem,
        scratch_shapes=[pltpu.VMEM((T * Bp, 4 * H), jnp.float32)],
    )(x_flat, w_ih, b, w_hh, w_fc, b_fc)

    # TODO(synk): optionally fuse the embedding gather too (tokens via scalar
    # prefetch in SMEM + VMEM-resident embed table) to collapse the whole
    # forward into a single pallas_call.
    # TODO(synk): for real batch sizes on v7x, add a leading "parallel" batch
    # grid axis so the two TensorCores run independent batch slices.
    return out[:B].reshape(B, chord_size, vocab_size)


def init_params(key, vocab_size=128, embed_dim=64, hidden_dim=128, chord_size=4):
    ks = jax.random.split(key, 7)
    s = 0.1
    embed = s * jax.random.normal(ks[0], (vocab_size, embed_dim), jnp.float32)
    # Stored transposed relative to PyTorch ((4H, E)/(4H, H) there).
    w_ih = s * jax.random.normal(ks[1], (embed_dim, 4 * hidden_dim), jnp.float32)
    w_hh = s * jax.random.normal(ks[2], (hidden_dim, 4 * hidden_dim), jnp.float32)
    b_ih = s * jax.random.normal(ks[3], (4 * hidden_dim,), jnp.float32)
    b_hh = s * jax.random.normal(ks[4], (4 * hidden_dim,), jnp.float32)
    out_dim = vocab_size * chord_size
    w_fc = s * jax.random.normal(ks[5], (hidden_dim, out_dim), jnp.float32)
    b_fc = s * jax.random.normal(ks[6], (out_dim,), jnp.float32)
    return {
        "embed": embed,
        "w_ih": w_ih,
        "w_hh": w_hh,
        "b": (b_ih + b_hh).reshape(1, 4 * hidden_dim),
        "w_fc": w_fc,
        "b_fc": b_fc.reshape(1, out_dim),
        # bf16 matmul-operand copies, cast ONCE at init (no per-call cast ops).
        "w_ih_bf16": w_ih.astype(jnp.bfloat16),
        "w_hh_bf16": w_hh.astype(jnp.bfloat16),
        "w_fc_bf16": w_fc.astype(jnp.bfloat16),
    }


def reference_forward(tokens, params, *, chord_size, vocab_size):
    """Pure-JAX f32 reference of the PyTorch forward (correctness check)."""
    B, T = tokens.shape
    H = params["w_hh"].shape[0]
    x = jnp.take(params["embed"], tokens, axis=0)        # (B, T, E)
    h = jnp.zeros((B, H), jnp.float32)
    c = jnp.zeros((B, H), jnp.float32)

    def step(carry, x_t):
        h, c = carry
        gates = x_t @ params["w_ih"] + h @ params["w_hh"] + params["b"]
        i = jax.nn.sigmoid(gates[:, 0 * H:1 * H])
        f = jax.nn.sigmoid(gates[:, 1 * H:2 * H])
        g = jnp.tanh(gates[:, 2 * H:3 * H])
        o = jax.nn.sigmoid(gates[:, 3 * H:4 * H])
        c = f * c + i * g
        h = o * jnp.tanh(c)
        return (h, c), None

    (h, _), _ = jax.lax.scan(step, (h, c), jnp.transpose(x, (1, 0, 2)))
    out = h @ params["w_fc"] + params["b_fc"]
    return out.reshape(B, chord_size, vocab_size)


if __name__ == "__main__":
    vocab_size, embed_dim, hidden_dim, chord_size = 128, 64, 128, 4
    B, T = 2, 8

    key = jax.random.PRNGKey(0)
    kp, kx = jax.random.split(key)
    params = init_params(kp, vocab_size, embed_dim, hidden_dim, chord_size)
    tokens = jax.random.randint(kx, (B, T), 0, vocab_size, dtype=jnp.int32)

    fwd = jax.jit(functools.partial(chord_predictor_forward,
                                    chord_size=chord_size,
                                    vocab_size=vocab_size))
    out = jax.block_until_ready(fwd(tokens, params))
    assert out.shape == (B, chord_size, vocab_size)

    ref = jax.block_until_ready(
        reference_forward(tokens, params,
                          chord_size=chord_size, vocab_size=vocab_size))
    # Tolerance loosened (vs. 1e-4) because the kernel intentionally uses bf16
    # matmul operands with f32 accumulation, per the performance review.
    assert jnp.allclose(out, ref, atol=2e-2, rtol=2e-2), "mismatch vs reference"

    print("KERNEL_OK")
</pallas_src>

<mosaic_0001>
module attributes {stable_mosaic.version = 11 : i64} {
  func.func @lstm_fc_kernel(%arg0: memref<64x64xf32, #tpu.memory_space<vmem>>, %arg1: memref<64x512xbf16, #tpu.memory_space<vmem>>, %arg2: memref<1x512xf32, #tpu.memory_space<vmem>>, %arg3: memref<128x512xbf16, #tpu.memory_space<vmem>>, %arg4: memref<128x512xbf16, #tpu.memory_space<vmem>>, %arg5: memref<1x512xf32, #tpu.memory_space<vmem>>, %arg6: memref<8x512xf32, #tpu.memory_space<vmem>>, %arg7: memref<64x512xf32, #tpu.memory_space<vmem>>) attributes {dimension_semantics = [], scalar_prefetch = 0 : i64, scratch_operands = 1 : i64, tpu.core_type = #tpu.core_type<tc>} {
    %c0 = arith.constant 0 : index
    %c0_0 = arith.constant 0 : index
    %0 = vector.load %arg0[%c0, %c0_0] : memref<64x64xf32, #tpu.memory_space<vmem>>, vector<64x64xf32>
    %1 = arith.truncf %0 : vector<64x64xf32> to vector<64x64xbf16>
    %c0_1 = arith.constant 0 : index
    %c0_2 = arith.constant 0 : index
    %2 = vector.load %arg1[%c0_1, %c0_2] : memref<64x512xbf16, #tpu.memory_space<vmem>>, vector<64x512xbf16>
    %cst = arith.constant dense<0.000000e+00> : vector<64x512xf32>
    %3 = tpu.matmul %1, %2, %cst {dimension_numbers = #tpu.dot_dimension_numbers<[1], [0], [0], [1], [0, 0, 1, 1], [], []>} : vector<64x64xbf16>, vector<64x512xbf16>, vector<64x512xf32> -> vector<64x512xf32>
    %c0_3 = arith.constant 0 : index
    %c0_4 = arith.constant 0 : index
    %4 = vector.load %arg2[%c0_3, %c0_4] : memref<1x512xf32, #tpu.memory_space<vmem>>, vector<1x512xf32>
    %5 = vector.broadcast %4 : vector<1x512xf32> to vector<64x512xf32>
    %6 = arith.addf %3, %5 : vector<64x512xf32>
    %c0_5 = arith.constant 0 : index
    %c0_6 = arith.constant 0 : index
    %7 = vector.load %arg7[%c0_5, %c0_6] : memref<64x512xf32, #tpu.memory_space<vmem>>, vector<64x512xf32>
    tpu.vector_store %arg7[%c0_5, %c0_6], %6 {strides = array<i32>} : memref<64x512xf32, #tpu.memory_space<vmem>>, vector<64x512xf32>,
    %cst_7 = arith.constant 0.000000e+00 : f32
    %8 = vector.broadcast %cst_7 : f32 to vector<8x128xf32>
    %cst_8 = arith.constant 0.000000e+00 : f32
    %9 = vector.broadcast %cst_8 : f32 to vector<8x128xf32>
    %c0_i32 = arith.constant 0 : i32
    %c8_i32 = arith.constant 8 : i32
    %10 = arith.muli %c0_i32, %c8_i32 : i32
    %11 = arith.index_cast %10 : i32 to index
    %c0_9 = arith.constant 0 : index
    %12 = vector.load %arg7[%11, %c0_9] : memref<64x512xf32, #tpu.memory_space<vmem>>, vector<8x512xf32>
    %13 = arith.truncf %8 : vector<8x128xf32> to vector<8x128xbf16>
    %c0_10 = arith.constant 0 : index
    %c0_11 = arith.constant 0 : index
    %14 = vector.load %arg3[%c0_10, %c0_11] : memref<128x512xbf16, #tpu.memory_space<vmem>>, vector<128x512xbf16>
    %cst_12 = arith.constant dense<0.000000e+00> : vector<8x512xf32>
    %15 = tpu.matmul %13, %14, %cst_12 {dimension_numbers = #tpu.dot_dimension_numbers<[1], [0], [0], [1], [0, 0, 1, 1], [], []>} : vector<8x128xbf16>, vector<128x512xbf16>, vector<8x512xf32> -> vector<8x512xf32>
    %16 = arith.addf %12, %15 : vector<8x512xf32>
    %17 = vector.extract_strided_slice %16 {offsets = [0, 0], sizes = [8, 128], strides = [1, 1]} : vector<8x512xf32> to vector<8x128xf32>
    %18 = arith.negf %17 : vector<8x128xf32>
    %19 = math.exp %18 : vector<8x128xf32>
    %cst_13 = arith.constant 1.000000e+00 : f32
    %20 = vector.broadcast %cst_13 : f32 to vector<8x128xf32>
    %21 = arith.addf %20, %19 : vector<8x128xf32>
    %22 = arith.divf %20, %21 : vector<8x128xf32>
    %23 = vector.extract_strided_slice %16 {offsets = [0, 128], sizes = [8, 128], strides = [1, 1]} : vector<8x512xf32> to vector<8x128xf32>
    %24 = arith.negf %23 : vector<8x128xf32>
    %25 = math.exp %24 : vector<8x128xf32>
    %cst_14 = arith.constant 1.000000e+00 : f32
    %26 = vector.broadcast %cst_14 : f32 to vector<8x128xf32>
    %27 = arith.addf %26, %25 : vector<8x128xf32>
    %28 = arith.divf %26, %27 : vector<8x128xf32>
    %29 = vector.extract_strided_slice %16 {offsets = [0, 256], sizes = [8, 128], strides = [1, 1]} : vector<8x512xf32> to vector<8x128xf32>
    %30 = math.tanh %29 : vector<8x128xf32>
    %31 = vector.extract_strided_slice %16 {offsets = [0, 384], sizes = [8, 128], strides = [1, 1]} : vector<8x512xf32> to vector<8x128xf32>
    %32 = arith.negf %31 : vector<8x128xf32>
    %33 = math.exp %32 : vector<8x128xf32>
    %cst_15 = arith.constant 1.000000e+00 : f32
    %34 = vector.broadcast %cst_15 : f32 to vector<8x128xf32>
    %35 = arith.addf %34, %33 : vector<8x128xf32>
    %36 = arith.divf %34, %35 : vector<8x128xf32>
    %37 = arith.mulf %28, %9 : vector<8x128xf32>
    %38 = arith.mulf %22, %30 : vector<8x128xf32>
    %39 = arith.addf %37, %38 : vector<8x128xf32>
    %40 = math.tanh %39 : vector<8x128xf32>
    %41 = arith.mulf %36, %40 : vector<8x128xf32>
    %c1_i32 = arith.constant 1 : i32
    %c8_i32_16 = arith.constant 8 : i32
    %42 = arith.muli %c1_i32, %c8_i32_16 : i32
    %43 = arith.index_cast %42 : i32 to index
    %c0_17 = arith.constant 0 : index
    %44 = vector.load %arg7[%43, %c0_17] : memref<64x512xf32, #tpu.memory_space<vmem>>, vector<8x512xf32>
    %45 = arith.truncf %41 : vector<8x128xf32> to vector<8x128xbf16>
    %c0_18 = arith.constant 0 : index
    %c0_19 = arith.constant 0 : index
    %46 = vector.load %arg3[%c0_18, %c0_19] : memref<128x512xbf16, #tpu.memory_space<vmem>>, vector<128x512xbf16>
    %cst_20 = arith.constant dense<0.000000e+00> : vector<8x512xf32>
    %47 = tpu.matmul %45, %46, %cst_20 {dimension_numbers = #tpu.dot_dimension_numbers<[1], [0], [0], [1], [0, 0, 1, 1], [], []>} : vector<8x128xbf16>, vector<128x512xbf16>, vector<8x512xf32> -> vector<8x512xf32>
    %48 = arith.addf %44, %47 : vector<8x512xf32>
    %49 = vector.extract_strided_slice %48 {offsets = [0, 0], sizes = [8, 128], strides = [1, 1]} : vector<8x512xf32> to vector<8x128xf32>
    %50 = arith.negf %49 : vector<8x128xf32>
    %51 = math.exp %50 : vector<8x128xf32>
    %cst_21 = arith.constant 1.000000e+00 : f32
    %52 = vector.broadcast %cst_21 : f32 to vector<8x128xf32>
    %53 = arith.addf %52, %51 : vector<8x128xf32>
    %54 = arith.divf %52, %53 : vector<8x128xf32>
    %55 = vector.extract_strided_slice %48 {offsets = [0, 128], sizes = [8, 128], strides = [1, 1]} : vector<8x512xf32> to vector<8x128xf32>
    %56 = arith.negf %55 : vector<8x128xf32>
    %57 = math.exp %56 : vector<8x128xf32>
    %cst_22 = arith.constant 1.000000e+00 : f32
    %58 = vector.broadcast %cst_22 : f32 to vector<8x128xf32>
    %59 = arith.addf %58, %57 : vector<8x128xf32>
    %60 = arith.divf %58, %59 : vector<8x128xf32>
    %61 = vector.extract_strided_slice %48 {offsets = [0, 256], sizes = [8, 128], strides = [1, 1]} : vector<8x512xf32> to vector<8x128xf32>
    %62 = math.tanh %61 : vector<8x128xf32>
    %63 = vector.extract_strided_slice %48 {offsets = [0, 384], sizes = [8, 128], strides = [1, 1]} : vector<8x512xf32> to vector<8x128xf32>
    %64 = arith.negf %63 : vector<8x128xf32>
    %65 = math.exp %64 : vector<8x128xf32>
    %cst_23 = arith.constant 1.000000e+00 : f32
    %66 = vector.broadcast %cst_23 : f32 to vector<8x128xf32>
    %67 = arith.addf %66, %65 : vector<8x128xf32>
    %68 = arith.divf %66, %67 : vector<8x128xf32>
    %69 = arith.mulf %60, %39 : vector<8x128xf32>
    %70 = arith.mulf %54, %62 : vector<8x128xf32>
    %71 = arith.addf %69, %70 : vector<8x128xf32>
    %72 = math.tanh %71 : vector<8x128xf32>
    %73 = arith.mulf %68, %72 : vector<8x128xf32>
    %c2_i32 = arith.constant 2 : i32
    %c8_i32_24 = arith.constant 8 : i32
    %74 = arith.muli %c2_i32, %c8_i32_24 : i32
    %75 = arith.index_cast %74 : i32 to index
    %c0_25 = arith.constant 0 : index
    %76 = vector.load %arg7[%75, %c0_25] : memref<64x512xf32, #tpu.memory_space<vmem>>, vector<8x512xf32>
    %77 = arith.truncf %73 : vector<8x128xf32> to vector<8x128xbf16>
    %c0_26 = arith.constant 0 : index
    %c0_27 = arith.constant 0 : index
    %78 = vector.load %arg3[%c0_26, %c0_27] : memref<128x512xbf16, #tpu.memory_space<vmem>>, vector<128x512xbf16>
    %cst_28 = arith.constant dense<0.000000e+00> : vector<8x512xf32>
    %79 = tpu.matmul %77, %78, %cst_28 {dimension_numbers = #tpu.dot_dimension_numbers<[1], [0], [0], [1], [0, 0, 1, 1], [], []>} : vector<8x128xbf16>, vector<128x512xbf16>, vector<8x512xf32> -> vector<8x512xf32>
    %80 = arith.addf %76, %79 : vector<8x512xf32>
    %81 = vector.extract_strided_slice %80 {offsets = [0, 0], sizes = [8, 128], strides = [1, 1]} : vector<8x512xf32> to vector<8x128xf32>
    %82 = arith.negf %81 : vector<8x128xf32>
    %83 = math.exp %82 : vector<8x128xf32>
    %cst_29 = arith.constant 1.000000e+00 : f32
    %84 = vector.broadcast %cst_29 : f32 to vector<8x128xf32>
    %85 = arith.addf %84, %83 : vector<8x128xf32>
    %86 = arith.divf %84, %85 : vector<8x128xf32>
    %87 = vector.extract_strided_slice %80 {offsets = [0, 128], sizes = [8, 128], strides = [1, 1]} : vector<8x512xf32> to vector<8x128xf32>
    %88 = arith.negf %87 : vector<8x128xf32>
    %89 = math.exp %88 : vector<8x128xf32>
    %cst_30 = arith.constant 1.000000e+00 : f32
    %90 = vector.broadcast %cst_30 : f32 to vector<8x128xf32>
    %91 = arith.addf %90, %89 : vector<8x128xf32>
    %92 = arith.divf %90, %91 : vector<8x128xf32>
    %93 = vector.extract_strided_slice %80 {offsets = [0, 256], sizes = [8, 128], strides = [1, 1]} : vector<8x512xf32> to vector<8x128xf32>
    %94 = math.tanh %93 : vector<8x128xf32>
    %95 = vector.extract_strided_slice %80 {offsets = [0, 384], sizes = [8, 128], strides = [1, 1]} : vector<8x512xf32> to vector<8x128xf32>
    %96 = arith.negf %95 : vector<8x128xf32>
    %97 = math.exp %96 : vector<8x128xf32>
    %cst_31 = arith.constant 1.000000e+00 : f32
    %98 = vector.broadcast %cst_31 : f32 to vector<8x128xf32>
    %99 = arith.addf %98, %97 : vector<8x128xf32>
    %100 = arith.divf %98, %99 : vector<8x128xf32>
    %101 = arith.mulf %92, %71 : vector<8x128xf32>
    %102 = arith.mulf %86, %94 : vector<8x128xf32>
    %103 = arith.addf %101, %102 : vector<8x128xf32>
    %104 = math.tanh %103 : vector<8x128xf32>
    %105 = arith.mulf %100, %104 : vector<8x128xf32>
    %c3_i32 = arith.constant 3 : i32
    %c8_i32_32 = arith.constant 8 : i32
    %106 = arith.muli %c3_i32, %c8_i32_32 : i32
    %107 = arith.index_cast %106 : i32 to index
    %c0_33 = arith.constant 0 : index
    %108 = vector.load %arg7[%107, %c0_33] : memref<64x512xf32, #tpu.memory_space<vmem>>, vector<8x512xf32>
    %109 = arith.truncf %105 : vector<8x128xf32> to vector<8x128xbf16>
    %c0_34 = arith.constant 0 : index
    %c0_35 = arith.constant 0 : index
    %110 = vector.load %arg3[%c0_34, %c0_35] : memref<128x512xbf16, #tpu.memory_space<vmem>>, vector<128x512xbf16>
    %cst_36 = arith.constant dense<0.000000e+00> : vector<8x512xf32>
    %111 = tpu.matmul %109, %110, %cst_36 {dimension_numbers = #tpu.dot_dimension_numbers<[1], [0], [0], [1], [0, 0, 1, 1], [], []>} : vector<8x128xbf16>, vector<128x512xbf16>, vector<8x512xf32> -> vector<8x512xf32>
    %112 = arith.addf %108, %111 : vector<8x512xf32>
    %113 = vector.extract_strided_slice %112 {offsets = [0, 0], sizes = [8, 128], strides = [1, 1]} : vector<8x512xf32> to vector<8x128xf32>
    %114 = arith.negf %113 : vector<8x128xf32>
    %115 = math.exp %114 : vector<8x128xf32>
    %cst_37 = arith.constant 1.000000e+00 : f32
    %116 = vector.broadcast %cst_37 : f32 to vector<8x128xf32>
    %117 = arith.addf %116, %115 : vector<8x128xf32>
    %118 = arith.divf %116, %117 : vector<8x128xf32>
    %119 = vector.extract_strided_slice %112 {offsets = [0, 128], sizes = [8, 128], strides = [1, 1]} : vector<8x512xf32> to vector<8x128xf32>
    %120 = arith.negf %119 : vector<8x128xf32>
    %121 = math.exp %120 : vector<8x128xf32>
    %cst_38 = arith.constant 1.000000e+00 : f32
    %122 = vector.broadcast %cst_38 : f32 to vector<8x128xf32>
    %123 = arith.addf %122, %121 : vector<8x128xf32>
    %124 = arith.divf %122, %123 : vector<8x128xf32>
    %125 = vector.extract_strided_slice %112 {offsets = [0, 256], sizes = [8, 128], strides = [1, 1]} : vector<8x512xf32> to vector<8x128xf32>
    %126 = math.tanh %125 : vector<8x128xf32>
    %127 = vector.extract_strided_slice %112 {offsets = [0, 384], sizes = [8, 128], strides = [1, 1]} : vector<8x512xf32> to vector<8x128xf32>
    %128 = arith.negf %127 : vector<8x128xf32>
    %129 = math.exp %128 : vector<8x128xf32>
    %cst_39 = arith.constant 1.000000e+00 : f32
    %130 = vector.broadcast %cst_39 : f32 to vector<8x128xf32>
    %131 = arith.addf %130, %129 : vector<8x128xf32>
    %132 = arith.divf %130, %131 : vector<8x128xf32>
    %133 = arith.mulf %124, %103 : vector<8x128xf32>
    %134 = arith.mulf %118, %126 : vector<8x128xf32>
    %135 = arith.addf %133, %134 : vector<8x128xf32>
    %136 = math.tanh %135 : vector<8x128xf32>
    %137 = arith.mulf %132, %136 : vector<8x128xf32>
    %c4_i32 = arith.constant 4 : i32
    %c8_i32_40 = arith.constant 8 : i32
    %138 = arith.muli %c4_i32, %c8_i32_40 : i32
    %139 = arith.index_cast %138 : i32 to index
    %c0_41 = arith.constant 0 : index
    %140 = vector.load %arg7[%139, %c0_41] : memref<64x512xf32, #tpu.memory_space<vmem>>, vector<8x512xf32>
    %141 = arith.truncf %137 : vector<8x128xf32> to vector<8x128xbf16>
    %c0_42 = arith.constant 0 : index
    %c0_43 = arith.constant 0 : index
    %142 = vector.load %arg3[%c0_42, %c0_43] : memref<128x512xbf16, #tpu.memory_space<vmem>>, vector<128x512xbf16>
    %cst_44 = arith.constant dense<0.000000e+00> : vector<8x512xf32>
    %143 = tpu.matmul %141, %142, %cst_44 {dimension_numbers = #tpu.dot_dimension_numbers<[1], [0], [0], [1], [0, 0, 1, 1], [], []>} : vector<8x128xbf16>, vector<128x512xbf16>, vector<8x512xf32> -> vector<8x512xf32>
    %144 = arith.addf %140, %143 : vector<8x512xf32>
    %145 = vector.extract_strided_slice %144 {offsets = [0, 0], sizes = [8, 128], strides = [1, 1]} : vector<8x512xf32> to vector<8x128xf32>
    %146 = arith.negf %145 : vector<8x128xf32>
    %147 = math.exp %146 : vector<8x128xf32>
    %cst_45 = arith.constant 1.000000e+00 : f32
    %148 = vector.broadcast %cst_45 : f32 to vector<8x128xf32>
    %149 = arith.addf %148, %147 : vector<8x128xf32>
    %150 = arith.divf %148, %149 : vector<8x128xf32>
    %151 = vector.extract_strided_slice %144 {offsets = [0, 128], sizes = [8, 128], strides = [1, 1]} : vector<8x512xf32> to vector<8x128xf32>
    %152 = arith.negf %151 : vector<8x128xf32>
    %153 = math.exp %152 : vector<8x128xf32>
    %cst_46 = arith.constant 1.000000e+00 : f32
    %154 = vector.broadcast %cst_46 : f32 to vector<8x128xf32>
    %155 = arith.addf %154, %153 : vector<8x128xf32>
    %156 = arith.divf %154, %155 : vector<8x128xf32>
    %157 = vector.extract_strided_slice %144 {offsets = [0, 256], sizes = [8, 128], strides = [1, 1]} : vector<8x512xf32> to vector<8x128xf32>
    %158 = math.tanh %157 : vector<8x128xf32>
    %159 = vector.extract_strided_slice %144 {offsets = [0, 384], sizes = [8, 128], strides = [1, 1]} : vector<8x512xf32> to vector<8x128xf32>
    %160 = arith.negf %159 : vector<8x128xf32>
    %161 = math.exp %160 : vector<8x128xf32>
    %cst_47 = arith.constant 1.000000e+00 : f32
    %162 = vector.broadcast %cst_47 : f32 to vector<8x128xf32>
    %163 = arith.addf %162, %161 : vector<8x128xf32>
    %164 = arith.divf %162, %163 : vector<8x128xf32>
    %165 = arith.mulf %156, %135 : vector<8x128xf32>
    %166 = arith.mulf %150, %158 : vector<8x128xf32>
    %167 = arith.addf %165, %166 : vector<8x128xf32>
    %168 = math.tanh %167 : vector<8x128xf32>
    %169 = arith.mulf %164, %168 : vector<8x128xf32>
    %c5_i32 = arith.constant 5 : i32
    %c8_i32_48 = arith.constant 8 : i32
    %170 = arith.muli %c5_i32, %c8_i32_48 : i32
    %171 = arith.index_cast %170 : i32 to index
    %c0_49 = arith.constant 0 : index
    %172 = vector.load %arg7[%171, %c0_49] : memref<64x512xf32, #tpu.memory_space<vmem>>, vector<8x512xf32>
    %173 = arith.truncf %169 : vector<8x128xf32> to vector<8x128xbf16>
    %c0_50 = arith.constant 0 : index
    %c0_51 = arith.constant 0 : index
    %174 = vector.load %arg3[%c0_50, %c0_51] : memref<128x512xbf16, #tpu.memory_space<vmem>>, vector<128x512xbf16>
    %cst_52 = arith.constant dense<0.000000e+00> : vector<8x512xf32>
    %175 = tpu.matmul %173, %174, %cst_52 {dimension_numbers = #tpu.dot_dimension_numbers<[1], [0], [0], [1], [0, 0, 1, 1], [], []>} : vector<8x128xbf16>, vector<128x512xbf16>, vector<8x512xf32> -> vector<8x512xf32>
    %176 = arith.addf %172, %175 : vector<8x512xf32>
    %177 = vector.extract_strided_slice %176 {offsets = [0, 0], sizes = [8, 128], strides = [1, 1]} : vector<8x512xf32> to vector<8x128xf32>
    %178 = arith.negf %177 : vector<8x128xf32>
    %179 = math.exp %178 : vector<8x128xf32>
    %cst_53 = arith.constant 1.000000e+00 : f32
    %180 = vector.broadcast %cst_53 : f32 to vector<8x128xf32>
    %181 = arith.addf %180, %179 : vector<8x128xf32>
    %182 = arith.divf %180, %181 : vector<8x128xf32>
    %183 = vector.extract_strided_slice %176 {offsets = [0, 128], sizes = [8, 128], strides = [1, 1]} : vector<8x512xf32> to vector<8x128xf32>
    %184 = arith.negf %183 : vector<8x128xf32>
    %185 = math.exp %184 : vector<8x128xf32>
    %cst_54 = arith.constant 1.000000e+00 : f32
    %186 = vector.broadcast %cst_54 : f32 to vector<8x128xf32>
    %187 = arith.addf %186, %185 : vector<8x128xf32>
    %188 = arith.divf %186, %187 : vector<8x128xf32>
    %189 = vector.extract_strided_slice %176 {offsets = [0, 256], sizes = [8, 128], strides = [1, 1]} : vector<8x512xf32> to vector<8x128xf32>
    %190 = math.tanh %189 : vector<8x128xf32>
    %191 = vector.extract_strided_slice %176 {offsets = [0, 384], sizes = [8, 128], strides = [1, 1]} : vector<8x512xf32> to vector<8x128xf32>
    %192 = arith.negf %191 : vector<8x128xf32>
    %193 = math.exp %192 : vector<8x128xf32>
    %cst_55 = arith.constant 1.000000e+00 : f32
    %194 = vector.broadcast %cst_55 : f32 to vector<8x128xf32>
    %195 = arith.addf %194, %193 : vector<8x128xf32>
    %196 = arith.divf %194, %195 : vector<8x128xf32>
    %197 = arith.mulf %188, %167 : vector<8x128xf32>
    %198 = arith.mulf %182, %190 : vector<8x128xf32>
    %199 = arith.addf %197, %198 : vector<8x128xf32>
    %200 = math.tanh %199 : vector<8x128xf32>
    %201 = arith.mulf %196, %200 : vector<8x128xf32>
    %c6_i32 = arith.constant 6 : i32
    %c8_i32_56 = arith.constant 8 : i32
    %202 = arith.muli %c6_i32, %c8_i32_56 : i32
    %203 = arith.index_cast %202 : i32 to index
    %c0_57 = arith.constant 0 : index
    %204 = vector.load %arg7[%203, %c0_57] : memref<64x512xf32, #tpu.memory_space<vmem>>, vector<8x512xf32>
    %205 = arith.truncf %201 : vector<8x128xf32> to vector<8x128xbf16>
    %c0_58 = arith.constant 0 : index
    %c0_59 = arith.constant 0 : index
    %206 = vector.load %arg3[%c0_58, %c0_59] : memref<128x512xbf16, #tpu.memory_space<vmem>>, vector<128x512xbf16>
    %cst_60 = arith.constant dense<0.000000e+00> : vector<8x512xf32>
    %207 = tpu.matmul %205, %206, %cst_60 {dimension_numbers = #tpu.dot_dimension_numbers<[1], [0], [0], [1], [0, 0, 1, 1], [], []>} : vector<8x128xbf16>, vector<128x512xbf16>, vector<8x512xf32> -> vector<8x512xf32>
    %208 = arith.addf %204, %207 : vector<8x512xf32>
    %209 = vector.extract_strided_slice %208 {offsets = [0, 0], sizes = [8, 128], strides = [1, 1]} : vector<8x512xf32> to vector<8x128xf32>
    %210 = arith.negf %209 : vector<8x128xf32>
    %211 = math.exp %210 : vector<8x128xf32>
    %cst_61 = arith.constant 1.000000e+00 : f32
    %212 = vector.broadcast %cst_61 : f32 to vector<8x128xf32>
    %213 = arith.addf %212, %211 : vector<8x128xf32>
    %214 = arith.divf %212, %213 : vector<8x128xf32>
    %215 = vector.extract_strided_slice %208 {offsets = [0, 128], sizes = [8, 128], strides = [1, 1]} : vector<8x512xf32> to vector<8x128xf32>
    %216 = arith.negf %215 : vector<8x128xf32>
    %217 = math.exp %216 : vector<8x128xf32>
    %cst_62 = arith.constant 1.000000e+00 : f32
    %218 = vector.broadcast %cst_62 : f32 to vector<8x128xf32>
    %219 = arith.addf %218, %217 : vector<8x128xf32>
    %220 = arith.divf %218, %219 : vector<8x128xf32>
    %221 = vector.extract_strided_slice %208 {offsets = [0, 256], sizes = [8, 128], strides = [1, 1]} : vector<8x512xf32> to vector<8x128xf32>
    %222 = math.tanh %221 : vector<8x128xf32>
    %223 = vector.extract_strided_slice %208 {offsets = [0, 384], sizes = [8, 128], strides = [1, 1]} : vector<8x512xf32> to vector<8x128xf32>
    %224 = arith.negf %223 : vector<8x128xf32>
    %225 = math.exp %224 : vector<8x128xf32>
    %cst_63 = arith.constant 1.000000e+00 : f32
    %226 = vector.broadcast %cst_63 : f32 to vector<8x128xf32>
    %227 = arith.addf %226, %225 : vector<8x128xf32>
    %228 = arith.divf %226, %227 : vector<8x128xf32>
    %229 = arith.mulf %220, %199 : vector<8x128xf32>
    %230 = arith.mulf %214, %222 : vector<8x128xf32>
    %231 = arith.addf %229, %230 : vector<8x128xf32>
    %232 = math.tanh %231 : vector<8x128xf32>
    %233 = arith.mulf %228, %232 : vector<8x128xf32>
    %c7_i32 = arith.constant 7 : i32
    %c8_i32_64 = arith.constant 8 : i32
    %234 = arith.muli %c7_i32, %c8_i32_64 : i32
    %235 = arith.index_cast %234 : i32 to index
    %c0_65 = arith.constant 0 : index
    %236 = vector.load %arg7[%235, %c0_65] : memref<64x512xf32, #tpu.memory_space<vmem>>, vector<8x512xf32>
    %237 = arith.truncf %233 : vector<8x128xf32> to vector<8x128xbf16>
    %c0_66 = arith.constant 0 : index
    %c0_67 = arith.constant 0 : index
    %238 = vector.load %arg3[%c0_66, %c0_67] : memref<128x512xbf16, #tpu.memory_space<vmem>>, vector<128x512xbf16>
    %cst_68 = arith.constant dense<0.000000e+00> : vector<8x512xf32>
    %239 = tpu.matmul %237, %238, %cst_68 {dimension_numbers = #tpu.dot_dimension_numbers<[1], [0], [0], [1], [0, 0, 1, 1], [], []>} : vector<8x128xbf16>, vector<128x512xbf16>, vector<8x512xf32> -> vector<8x512xf32>
    %240 = arith.addf %236, %239 : vector<8x512xf32>
    %241 = vector.extract_strided_slice %240 {offsets = [0, 0], sizes = [8, 128], strides = [1, 1]} : vector<8x512xf32> to vector<8x128xf32>
    %242 = arith.negf %241 : vector<8x128xf32>
    %243 = math.exp %242 : vector<8x128xf32>
    %cst_69 = arith.constant 1.000000e+00 : f32
    %244 = vector.broadcast %cst_69 : f32 to vector<8x128xf32>
    %245 = arith.addf %244, %243 : vector<8x128xf32>
    %246 = arith.divf %244, %245 : vector<8x128xf32>
    %247 = vector.extract_strided_slice %240 {offsets = [0, 128], sizes = [8, 128], strides = [1, 1]} : vector<8x512xf32> to vector<8x128xf32>
    %248 = arith.negf %247 : vector<8x128xf32>
    %249 = math.exp %248 : vector<8x128xf32>
    %cst_70 = arith.constant 1.000000e+00 : f32
    %250 = vector.broadcast %cst_70 : f32 to vector<8x128xf32>
    %251 = arith.addf %250, %249 : vector<8x128xf32>
    %252 = arith.divf %250, %251 : vector<8x128xf32>
    %253 = vector.extract_strided_slice %240 {offsets = [0, 256], sizes = [8, 128], strides = [1, 1]} : vector<8x512xf32> to vector<8x128xf32>
    %254 = math.tanh %253 : vector<8x128xf32>
    %255 = vector.extract_strided_slice %240 {offsets = [0, 384], sizes = [8, 128], strides = [1, 1]} : vector<8x512xf32> to vector<8x128xf32>
    %256 = arith.negf %255 : vector<8x128xf32>
    %257 = math.exp %256 : vector<8x128xf32>
    %cst_71 = arith.constant 1.000000e+00 : f32
    %258 = vector.broadcast %cst_71 : f32 to vector<8x128xf32>
    %259 = arith.addf %258, %257 : vector<8x128xf32>
    %260 = arith.divf %258, %259 : vector<8x128xf32>
    %261 = arith.mulf %252, %231 : vector<8x128xf32>
    %262 = arith.mulf %246, %254 : vector<8x128xf32>
    %263 = arith.addf %261, %262 : vector<8x128xf32>
    %264 = math.tanh %263 : vector<8x128xf32>
    %265 = arith.mulf %260, %264 : vector<8x128xf32>
    %c8_i32_72 = arith.constant 8 : i32
    %266 = arith.truncf %265 : vector<8x128xf32> to vector<8x128xbf16>
    %c0_73 = arith.constant 0 : index
    %c0_74 = arith.constant 0 : index
    %267 = vector.load %arg4[%c0_73, %c0_74] : memref<128x512xbf16, #tpu.memory_space<vmem>>, vector<128x512xbf16>
    %cst_75 = arith.constant dense<0.000000e+00> : vector<8x512xf32>
    %268 = tpu.matmul %266, %267, %cst_75 {dimension_numbers = #tpu.dot_dimension_numbers<[1], [0], [0], [1], [0, 0, 1, 1], [], []>} : vector<8x128xbf16>, vector<128x512xbf16>, vector<8x512xf32> -> vector<8x512xf32>
    %c0_76 = arith.constant 0 : index
    %c0_77 = arith.constant 0 : index
    %269 = vector.load %arg5[%c0_76, %c0_77] : memref<1x512xf32, #tpu.memory_space<vmem>>, vector<1x512xf32>
    %270 = vector.broadcast %269 : vector<1x512xf32> to vector<8x512xf32>
    %271 = arith.addf %268, %270 : vector<8x512xf32>
    %c0_78 = arith.constant 0 : index
    %c0_79 = arith.constant 0 : index
    %272 = vector.load %arg6[%c0_78, %c0_79] : memref<8x512xf32, #tpu.memory_space<vmem>>, vector<8x512xf32>
    tpu.vector_store %arg6[%c0_78, %c0_79], %271 {strides = array<i32>} : memref<8x512xf32, #tpu.memory_space<vmem>>, vector<8x512xf32>,
    return
  }
}

</mosaic_0001>

<llo_original>
// kernel: chord_predictor_forward.1
$region0: #{chord_predictor_forward.1}
  #allocation0 [shape = 'u32[]', space=smem, size = 0x4, offset = 0x4, fixed_abs, tag = 'smem constant byte address 0x4 - core index']
  #allocation1 [shape = 'u32[144,128]{1,0:T(1,128)}', space=vmem, size = 0x12000, scoped, tag = 'internal scratch']
  #allocation2 [shape = 'f32[64,512]{1,0:T(8,128)}', space=vmem, size = 0x20000, scoped, tag = 'scratch operand']
  %s0 = inlined_call_operand.vmem [shape: f32[64,64], index: 0, kind: input, shape index: {}]
  %s1 = inlined_call_operand.vmem [shape: bf16[64,512], index: 1, kind: input, shape index: {}]
  %s2 = inlined_call_operand.vmem [shape: f32[1,512], index: 2, kind: input, shape index: {}]
  %s3 = inlined_call_operand.vmem [shape: bf16[128,512], index: 3, kind: input, shape index: {}]
  %s4 = inlined_call_operand.vmem [shape: bf16[128,512], index: 4, kind: input, shape index: {}]
  %s5 = inlined_call_operand.vmem [shape: f32[1,512], index: 5, kind: input, shape index: {}]
  %s6 = inlined_call_operand.vmem [shape: f32[8,512], index: 6, kind: output, shape index: {}]
  %s7 = sld [smem:[#allocation0]]
  $region34: #{chord_predictor_forward.1} parent=0
    _
  %s9 = ssub.s32 1, %s7
  %s10 = scalar_select 0, %s9, %s7
  // Predicated region
  $region2: #{chord_predictor_forward.1} parent=0 // pred_check
    _
  $region3: #{chord_predictor_forward.1} parent=0 // pred_check_branch
    %12 = sbr.rel (0) target = $region5
  $region4: #{chord_predictor_forward.1} parent=0 // pred_region
    _
  $region5: #{chord_predictor_forward.1} parent=0 // pred_fallthru
    _
  // Predicated region
  $region6: #{chord_predictor_forward.1} parent=0 // pred_check
    _
  $region7: #{chord_predictor_forward.1} parent=0 // pred_check_branch
    %14 = sbr.rel (0) target = $region9
  $region8: #{chord_predictor_forward.1} parent=0 // pred_region
    _
  $region9: #{chord_predictor_forward.1} parent=0 // pred_fallthru
    _
  // Predicated region
  $region10: #{chord_predictor_forward.1} parent=0 // pred_check
    _
  $region11: #{chord_predictor_forward.1} parent=0 // pred_check_branch
    %16 = sbr.rel (0) target = $region13
  $region12: #{chord_predictor_forward.1} parent=0 // pred_region
    _
  $region13: #{chord_predictor_forward.1} parent=0 // pred_fallthru
    _
  // Predicated region
  $region14: #{chord_predictor_forward.1} parent=0 // pred_check
    _
  $region15: #{chord_predictor_forward.1} parent=0 // pred_check_branch
    %18 = sbr.rel (0) target = $region17
  $region16: #{chord_predictor_forward.1} parent=0 // pred_region
    _
  $region17: #{chord_predictor_forward.1} parent=0 // pred_fallthru
    _
  // Predicated region
  $region18: #{chord_predictor_forward.1} parent=0 // pred_check
    _
  $region19: #{chord_predictor_forward.1} parent=0 // pred_check_branch
    %20 = sbr.rel (0) target = $region21
  $region20: #{chord_predictor_forward.1} parent=0 // pred_region
    _
  $region21: #{chord_predictor_forward.1} parent=0 // pred_fallthru
    _
  // Predicated region
  $region22: #{chord_predictor_forward.1} parent=0 // pred_check
    _
  $region23: #{chord_predictor_forward.1} parent=0 // pred_check_branch
    %22 = sbr.rel (0) target = $region25
  $region24: #{chord_predictor_forward.1} parent=0 // pred_region
    _
  $region25: #{chord_predictor_forward.1} parent=0 // pred_fallthru
    _
  %v24 = vld [vmem:[%s0] sm:$0xff]
  %v25 = vld [vmem:[%s0 + $0x8] sm:$0xff]
  %v26 = vld [vmem:[%s0 + $0x10] sm:$0xff]
  %v27 = vld [vmem:[%s0 + $0x18] sm:$0xff]
  %v28 = vld [vmem:[%s0 + $0x20] sm:$0xff]
  %v29 = vld [vmem:[%s0 + $0x28] sm:$0xff]
  %v30 = vld [vmem:[%s0 + $0x30] sm:$0xff]
  %v31 = vld [vmem:[%s0 + $0x38] sm:$0xff]
  %v32 = vpack.c.bf16 %v25, %v24
  %v33 = vpack.c.bf16 %v27, %v26
  %v34 = vpack.c.bf16 %v29, %v28
  %v35 = vpack.c.bf16 %v31, %v30
  %v36 = vld [vmem:[%s1] sm:$0xff]
  %v37 = vld [vmem:[%s1 + $0x8] sm:$0xff]
  %v38 = vld [vmem:[%s1 + $0x10] sm:$0xff]
  %v39 = vld [vmem:[%s1 + $0x18] sm:$0xff]
  %v40 = vld [vmem:[%s1 + $0x20] sm:$0xff]
  %v41 = vld [vmem:[%s1 + $0x28] sm:$0xff]
  %v42 = vld [vmem:[%s1 + $0x30] sm:$0xff]
  %v43 = vld [vmem:[%s1 + $0x38] sm:$0xff]
  %v44 = vld [vmem:[%s1 + $0x40] sm:$0xff]
  %v45 = vld [vmem:[%s1 + $0x48] sm:$0xff]
  %v46 = vld [vmem:[%s1 + $0x50] sm:$0xff]
  %v47 = vld [vmem:[%s1 + $0x58] sm:$0xff]
  %v48 = vld [vmem:[%s1 + $0x60] sm:$0xff]
  %v49 = vld [vmem:[%s1 + $0x68] sm:$0xff]
  %v50 = vld [vmem:[%s1 + $0x70] sm:$0xff]
  %v51 = vld [vmem:[%s1 + $0x78] sm:$0xff]
  %v52 = vld [vmem:[%s2] sm:$0xf]
  %v54 = vlaneseq
  %v55 = vshrl.u32 %v54, 7
  %v56 = vsub.s32 0, %v55
  %v57 = vrot.slane %v52, %v56
  %v58 = vlaneseq
  %v59 = vshrl.u32 %v58, 7
  %v60 = vsub.s32 1, %v59
  %v61 = vrot.slane %v52, %v60
  %v62 = vlaneseq
  %v63 = vshrl.u32 %v62, 7
  %v64 = vsub.s32 2, %v63
  %v65 = vrot.slane %v52, %v64
  %v66 = vlaneseq
  %v67 = vshrl.u32 %v66, 7
  %v68 = vsub.s32 3, %v67
  %v69 = vrot.slane %v52, %v68
  %v90 = vunpack.c.l.b16 %v36
  %v91 = vunpack.c.h.b16 %v36
  %v92 = vunpack.c.l.b16 %v37
  %v93 = vunpack.c.h.b16 %v37
  %v94 = vunpack.c.l.b16 %v38
  %v95 = vunpack.c.h.b16 %v38
  %v96 = vunpack.c.l.b16 %v39
  %v97 = vunpack.c.h.b16 %v39
  %v98 = vunpack.c.l.b16 %v40
  %v99 = vunpack.c.h.b16 %v40
  %v100 = vunpack.c.l.b16 %v41
  %v101 = vunpack.c.h.b16 %v41
  %v102 = vunpack.c.l.b16 %v42
  %v103 = vunpack.c.h.b16 %v42
  %v104 = vunpack.c.l.b16 %v43
  %v105 = vunpack.c.h.b16 %v43
  %v106 = vunpack.c.l.b16 %v44
  %v107 = vunpack.c.h.b16 %v44
  %v108 = vunpack.c.l.b16 %v45
  %v109 = vunpack.c.h.b16 %v45
  %v110 = vunpack.c.l.b16 %v46
  %v111 = vunpack.c.h.b16 %v46
  %v112 = vunpack.c.l.b16 %v47
  %v113 = vunpack.c.h.b16 %v47
  %v114 = vunpack.c.l.b16 %v48
  %v115 = vunpack.c.h.b16 %v48
  %v116 = vunpack.c.l.b16 %v49
  %v117 = vunpack.c.h.b16 %v49
  %v118 = vunpack.c.l.b16 %v50
  %v119 = vunpack.c.h.b16 %v50
  %v120 = vunpack.c.l.b16 %v51
  %v121 = vunpack.c.h.b16 %v51
  %v122 = vpack.c.b16 %v94, %v90
  %v123 = vpack.c.b16 %v95, %v91
  %v124 = vpack.c.b16 %v96, %v92
  %v125 = vpack.c.b16 %v97, %v93
  %v126 = vpack.c.b16 %v102, %v98
  %v127 = vpack.c.b16 %v103, %v99
  %v128 = vpack.c.b16 %v104, %v100
  %v129 = vpack.c.b16 %v105, %v101
  %v130 = vpack.c.b16 %v110, %v106
  %v131 = vpack.c.b16 %v111, %v107
  %v132 = vpack.c.b16 %v112, %v108
  %v133 = vpack.c.b16 %v113, %v109
  %v134 = vpack.c.b16 %v118, %v114
  %v135 = vpack.c.b16 %v119, %v115
  %v136 = vpack.c.b16 %v120, %v116
  %v137 = vpack.c.b16 %v121, %v117
  %vm154 = vcmask 523264
  %v156 = vsel %vm154, %v32, 0
  %v159 = vsel %vm154, %v33, 0
  %v162 = vsel %vm154, %v34, 0
  %v165 = vsel %vm154, %v35, 0
  %167 = vmatprep.subr.bf16.mxu0 %v123
  %168 = vmatpush1.bf16.msra.mxu0 %v122
  %169 = vmatprep.subr.bf16.mxu0 %v127
  %170 = vmatpush1.bf16.msra.mxu0 %v126
  %171 = vmatprep.subr.bf16.mxu0 %v131
  %172 = vmatpush1.bf16.msra.mxu0 %v130
  %173 = vmatprep.subr.bf16.mxu0 %v135
  %174 = vmatpush1.bf16.msra.mxu0 %v134
  %175 = vmatprep.subr.bf16.mxu0 0
  %176 = vmatpush1.bf16.msra.mxu0 0
  %177 = vmatprep.subr.bf16.mxu0 0
  %178 = vmatpush1.bf16.msra.mxu0 0
  %179 = vmatprep.subr.bf16.mxu0 0
  %180 = vmatpush1.bf16.msra.mxu0 0
  %181 = vmatprep.subr.bf16.mxu0 0
  %182 = vmatpush1.bf16.msra.mxu0 0
  %183 = vmatprep.subr.bf16.mxu0 0
  %184 = vmatpush1.bf16.msra.mxu0 0
  %185 = vmatprep.subr.bf16.mxu0 0
  %186 = vmatpush1.bf16.msra.mxu0 0
  %187 = vmatprep.subr.bf16.mxu0 0
  %188 = vmatpush1.bf16.msra.mxu0 0
  %189 = vmatprep.subr.bf16.mxu0 0
  %190 = vmatpush1.bf16.msra.mxu0 0
  %191 = vmatprep.subr.bf16.mxu0 0
  %192 = vmatpush1.bf16.msra.mxu0 0
  %193 = vmatprep.subr.bf16.mxu0 0
  %194 = vmatpush1.bf16.msra.mxu0 0
  %195 = vmatprep.subr.bf16.mxu0 0
  %196 = vmatpush1.bf16.msra.mxu0 0
  %197 = vmatprep.subr.bf16.mxu0 0
  %198 = vmatpush1.bf16.msra.mxu0 0
  %199 = vmatprep.mubr.bf16.mxu0 0
  %200 = vmatmul.mubr.bf16.gmra.mrb[0].mxu0 %v156
  %v201 = vpop.f32.mrb[0].mxu0
  %v202 = vadd.f32 %v57, %v201
  %v203 = vpop.f32.mrb[0].mxu0
  %v204 = vadd.f32 %v61, %v203
  %v205 = vpop.f32.mrb[0].mxu0
  %v206 = vadd.f32 %v57, %v205
  %v207 = vpop.f32.mrb[0].mxu0
  %v208 = vadd.f32 %v61, %v207
  %209 = vmatprep.mubr.bf16.mxu0 0
  %210 = vmatmul.mubr.bf16.gmra.mrb[0].mxu0 %v159
  %v211 = vpop.f32.mrb[0].mxu0
  %v212 = vadd.f32 %v57, %v211
  %v213 = vpop.f32.mrb[0].mxu0
  %v214 = vadd.f32 %v61, %v213
  %v215 = vpop.f32.mrb[0].mxu0
  %v216 = vadd.f32 %v57, %v215
  %v217 = vpop.f32.mrb[0].mxu0
  %v218 = vadd.f32 %v61, %v217
  %219 = vmatprep.mubr.bf16.mxu0 0
  %220 = vmatmul.mubr.bf16.gmra.mrb[0].mxu0 %v162
  %v221 = vpop.f32.mrb[0].mxu0
  %v222 = vadd.f32 %v57, %v221
  %v223 = vpop.f32.mrb[0].mxu0
  %v224 = vadd.f32 %v61, %v223
  %v225 = vpop.f32.mrb[0].mxu0
  %v226 = vadd.f32 %v57, %v225
  %v227 = vpop.f32.mrb[0].mxu0
  %v228 = vadd.f32 %v61, %v227
  %229 = vmatprep.mubr.bf16.mxu0 0
  %230 = vmatmul.mubr.bf16.gmra.mrb[0].mxu0 %v165
  %v231 = vpop.f32.mrb[0].mxu0
  %v232 = vadd.f32 %v57, %v231
  %v233 = vpop.f32.mrb[0].mxu0
  %v234 = vadd.f32 %v61, %v233
  %v235 = vpop.f32.mrb[0].mxu0
  %v236 = vadd.f32 %v57, %v235
  %v237 = vpop.f32.mrb[0].mxu0
  %v238 = vadd.f32 %v61, %v237
  %239 = vdwg.mxu0
  %240 = vmatprep.subr.bf16.mxu0 %v125
  %241 = vmatpush1.bf16.msra.mxu0 %v124
  %242 = vmatprep.subr.bf16.mxu0 %v129
  %243 = vmatpush1.bf16.msra.mxu0 %v128
  %244 = vmatprep.subr.bf16.mxu0 %v133
  %245 = vmatpush1.bf16.msra.mxu0 %v132
  %246 = vmatprep.subr.bf16.mxu0 %v137
  %247 = vmatpush1.bf16.msra.mxu0 %v136
  %248 = vmatprep.subr.bf16.mxu0 0
  %249 = vmatpush1.bf16.msra.mxu0 0
  %250 = vmatprep.subr.bf16.mxu0 0
  %251 = vmatpush1.bf16.msra.mxu0 0
  %252 = vmatprep.subr.bf16.mxu0 0
  %253 = vmatpush1.bf16.msra.mxu0 0
  %254 = vmatprep.subr.bf16.mxu0 0
  %255 = vmatpush1.bf16.msra.mxu0 0
  %256 = vmatprep.subr.bf16.mxu0 0
  %257 = vmatpush1.bf16.msra.mxu0 0
  %258 = vmatprep.subr.bf16.mxu0 0
  %259 = vmatpush1.bf16.msra.mxu0 0
  %260 = vmatprep.subr.bf16.mxu0 0
  %261 = vmatpush1.bf16.msra.mxu0 0
  %262 = vmatprep.subr.bf16.mxu0 0
  %263 = vmatpush1.bf16.msra.mxu0 0
  %264 = vmatprep.subr.bf16.mxu0 0
  %265 = vmatpush1.bf16.msra.mxu0 0
  %266 = vmatprep.subr.bf16.mxu0 0
  %267 = vmatpush1.bf16.msra.mxu0 0
  %268 = vmatprep.subr.bf16.mxu0 0
  %269 = vmatpush1.bf16.msra.mxu0 0
  %270 = vmatprep.subr.bf16.mxu0 0
  %271 = vmatpush1.bf16.msra.mxu0 0
  %272 = vmatprep.mubr.bf16.mxu0 0
  %273 = vmatmul.mubr.bf16.gmra.mrb[0].mxu0 %v156
  %v274 = vpop.f32.mrb[0].mxu0
  %v275 = vadd.f32 %v65, %v274
  %v276 = vpop.f32.mrb[0].mxu0
  %v277 = vadd.f32 %v69, %v276
  %v278 = vpop.f32.mrb[0].mxu0
  %v279 = vadd.f32 %v65, %v278
  %v280 = vpop.f32.mrb[0].mxu0
  %v281 = vadd.f32 %v69, %v280
  %282 = vmatprep.mubr.bf16.mxu0 0
  %283 = vmatmul.mubr.bf16.gmra.mrb[0].mxu0 %v159
  %v284 = vpop.f32.mrb[0].mxu0
  %v285 = vadd.f32 %v65, %v284
  %v286 = vpop.f32.mrb[0].mxu0
  %v287 = vadd.f32 %v69, %v286
  %v288 = vpop.f32.mrb[0].mxu0
  %v289 = vadd.f32 %v65, %v288
  %v290 = vpop.f32.mrb[0].mxu0
  %v291 = vadd.f32 %v69, %v290
  %292 = vmatprep.mubr.bf16.mxu0 0
  %293 = vmatmul.mubr.bf16.gmra.mrb[0].mxu0 %v162
  %v294 = vpop.f32.mrb[0].mxu0
  %v295 = vadd.f32 %v65, %v294
  %v296 = vpop.f32.mrb[0].mxu0
  %v297 = vadd.f32 %v69, %v296
  %v298 = vpop.f32.mrb[0].mxu0
  %v299 = vadd.f32 %v65, %v298
  %v300 = vpop.f32.mrb[0].mxu0
  %v301 = vadd.f32 %v69, %v300
  %302 = vmatprep.mubr.bf16.mxu0 0
  %303 = vmatmul.mubr.bf16.gmra.mrb[0].mxu0 %v165
  %v304 = vpop.f32.mrb[0].mxu0
  %v305 = vadd.f32 %v65, %v304
  %v306 = vpop.f32.mrb[0].mxu0
  %v307 = vadd.f32 %v69, %v306
  %v308 = vpop.f32.mrb[0].mxu0
  %v309 = vadd.f32 %v65, %v308
  %v310 = vpop.f32.mrb[0].mxu0
  %v311 = vadd.f32 %v69, %v310
  %312 = vdwg.mxu0
  %313 = vst [vmem:[#allocation2] sm:$0xff] %v202
  %314 = vst [vmem:[#allocation2 + $0x8] sm:$0xff] %v204
  %315 = vst [vmem:[#allocation2 + $0x10] sm:$0xff] %v275
  %316 = vst [vmem:[#allocation2 + $0x18] sm:$0xff] %v277
  %317 = vst [vmem:[#allocation2 + $0x20] sm:$0xff] %v206
  %318 = vst [vmem:[#allocation2 + $0x28] sm:$0xff] %v208
  %319 = vst [vmem:[#allocation2 + $0x30] sm:$0xff] %v279
  %320 = vst [vmem:[#allocation2 + $0x38] sm:$0xff] %v281
  %321 = vst [vmem:[#allocation2 + $0x40] sm:$0xff] %v212
  %322 = vst [vmem:[#allocation2 + $0x48] sm:$0xff] %v214
  %323 = vst [vmem:[#allocation2 + $0x50] sm:$0xff] %v285
  %324 = vst [vmem:[#allocation2 + $0x58] sm:$0xff] %v287
  %325 = vst [vmem:[#allocation2 + $0x60] sm:$0xff] %v216
  %326 = vst [vmem:[#allocation2 + $0x68] sm:$0xff] %v218
  %327 = vst [vmem:[#allocation2 + $0x70] sm:$0xff] %v289
  %328 = vst [vmem:[#allocation2 + $0x78] sm:$0xff] %v291
  %329 = vst [vmem:[#allocation2 + $0x80] sm:$0xff] %v222
  %330 = vst [vmem:[#allocation2 + $0x88] sm:$0xff] %v224
  %331 = vst [vmem:[#allocation2 + $0x90] sm:$0xff] %v295
  %332 = vst [vmem:[#allocation2 + $0x98] sm:$0xff] %v297
  %333 = vst [vmem:[#allocation2 + $0xa0] sm:$0xff] %v226
  %334 = vst [vmem:[#allocation2 + $0xa8] sm:$0xff] %v228
  %335 = vst [vmem:[#allocation2 + $0xb0] sm:$0xff] %v299
  %336 = vst [vmem:[#allocation2 + $0xb8] sm:$0xff] %v301
  %337 = vst [vmem:[#allocation2 + $0xc0] sm:$0xff] %v232
  %338 = vst [vmem:[#allocation2 + $0xc8] sm:$0xff] %v234
  %339 = vst [vmem:[#allocation2 + $0xd0] sm:$0xff] %v305
  %340 = vst [vmem:[#allocation2 + $0xd8] sm:$0xff] %v307
  %341 = vst [vmem:[#allocation2 + $0xe0] sm:$0xff] %v236
  %342 = vst [vmem:[#allocation2 + $0xe8] sm:$0xff] %v238
  %343 = vst [vmem:[#allocation2 + $0xf0] sm:$0xff] %v309
  %344 = vst [vmem:[#allocation2 + $0xf8] sm:$0xff] %v311
  %v345 = vld [vmem:[#allocation2] sm:$0xff]
  %v346 = vld [vmem:[#allocation2 + $0x8] sm:$0xff]
  %v347 = vld [vmem:[#allocation2 + $0x10] sm:$0xff]
  %v348 = vld [vmem:[#allocation2 + $0x18] sm:$0xff]
  %v349 = vld [vmem:[%s3] sm:$0xff]
  %v350 = vld [vmem:[%s3 + $0x8] sm:$0xff]
  %v351 = vld [vmem:[%s3 + $0x10] sm:$0xff]
  %v352 = vld [vmem:[%s3 + $0x18] sm:$0xff]
  %v353 = vld [vmem:[%s3 + $0x20] sm:$0xff]
  %v354 = vld [vmem:[%s3 + $0x28] sm:$0xff]
  %v355 = vld [vmem:[%s3 + $0x30] sm:$0xff]
  %v356 = vld [vmem:[%s3 + $0x38] sm:$0xff]
  %v357 = vld [vmem:[%s3 + $0x40] sm:$0xff]
  %v358 = vld [vmem:[%s3 + $0x48] sm:$0xff]
  %v359 = vld [vmem:[%s3 + $0x50] sm:$0xff]
  %v360 = vld [vmem:[%s3 + $0x58] sm:$0xff]
  %v361 = vld [vmem:[%s3 + $0x60] sm:$0xff]
  %v362 = vld [vmem:[%s3 + $0x68] sm:$0xff]
  %v363 = vld [vmem:[%s3 + $0x70] sm:$0xff]
  %v364 = vld [vmem:[%s3 + $0x78] sm:$0xff]
  %v365 = vld [vmem:[%s3 + $0x80] sm:$0xff]
  %v366 = vld [vmem:[%s3 + $0x88] sm:$0xff]
  %v367 = vld [vmem:[%s3 + $0x90] sm:$0xff]
  %v368 = vld [vmem:[%s3 + $0x98] sm:$0xff]
  %v369 = vld [vmem:[%s3 + $0xa0] sm:$0xff]
  %v370 = vld [vmem:[%s3 + $0xa8] sm:$0xff]
  %v371 = vld [vmem:[%s3 + $0xb0] sm:$0xff]
  %v372 = vld [vmem:[%s3 + $0xb8] sm:$0xff]
  %v373 = vld [vmem:[%s3 + $0xc0] sm:$0xff]
  %v374 = vld [vmem:[%s3 + $0xc8] sm:$0xff]
  %v375 = vld [vmem:[%s3 + $0xd0] sm:$0xff]
  %v376 = vld [vmem:[%s3 + $0xd8] sm:$0xff]
  %v377 = vld [vmem:[%s3 + $0xe0] sm:$0xff]
  %v378 = vld [vmem:[%s3 + $0xe8] sm:$0xff]
  %v379 = vld [vmem:[%s3 + $0xf0] sm:$0xff]
  %v380 = vld [vmem:[%s3 + $0xf8] sm:$0xff]
  %v413 = vunpack.c.l.b16 %v349
  %v414 = vunpack.c.h.b16 %v349
  %v415 = vunpack.c.l.b16 %v350
  %v416 = vunpack.c.h.b16 %v350
  %v417 = vunpack.c.l.b16 %v351
  %v418 = vunpack.c.h.b16 %v351
  %v419 = vunpack.c.l.b16 %v352
  %v420 = vunpack.c.h.b16 %v352
  %v421 = vunpack.c.l.b16 %v353
  %v422 = vunpack.c.h.b16 %v353
  %v423 = vunpack.c.l.b16 %v354
  %v424 = vunpack.c.h.b16 %v354
  %v425 = vunpack.c.l.b16 %v355
  %v426 = vunpack.c.h.b16 %v355
  %v427 = vunpack.c.l.b16 %v356
  %v428 = vunpack.c.h.b16 %v356
  %v429 = vunpack.c.l.b16 %v357
  %v430 = vunpack.c.h.b16 %v357
  %v431 = vunpack.c.l.b16 %v358
  %v432 = vunpack.c.h.b16 %v358
  %v433 = vunpack.c.l.b16 %v359
  %v434 = vunpack.c.h.b16 %v359
  %v435 = vunpack.c.l.b16 %v360
  %v436 = vunpack.c.h.b16 %v360
  %v437 = vunpack.c.l.b16 %v361
  %v438 = vunpack.c.h.b16 %v361
  %v439 = vunpack.c.l.b16 %v362
  %v440 = vunpack.c.h.b16 %v362
  %v441 = vunpack.c.l.b16 %v363
  %v442 = vunpack.c.h.b16 %v363
  %v443 = vunpack.c.l.b16 %v364
  %v444 = vunpack.c.h.b16 %v364
  %v445 = vunpack.c.l.b16 %v365
  %v446 = vunpack.c.h.b16 %v365
  %v447 = vunpack.c.l.b16 %v366
  %v448 = vunpack.c.h.b16 %v366
  %v449 = vunpack.c.l.b16 %v367
  %v450 = vunpack.c.h.b16 %v367
  %v451 = vunpack.c.l.b16 %v368
  %v452 = vunpack.c.h.b16 %v368
  %v453 = vunpack.c.l.b16 %v369
  %v454 = vunpack.c.h.b16 %v369
  %v455 = vunpack.c.l.b16 %v370
  %v456 = vunpack.c.h.b16 %v370
  %v457 = vunpack.c.l.b16 %v371
  %v458 = vunpack.c.h.b16 %v371
  %v459 = vunpack.c.l.b16 %v372
  %v460 = vunpack.c.h.b16 %v372
  %v461 = vunpack.c.l.b16 %v373
  %v462 = vunpack.c.h.b16 %v373
  %v463 = vunpack.c.l.b16 %v374
  %v464 = vunpack.c.h.b16 %v374
  %v465 = vunpack.c.l.b16 %v375
  %v466 = vunpack.c.h.b16 %v375
  %v467 = vunpack.c.l.b16 %v376
  %v468 = vunpack.c.h.b16 %v376
  %v469 = vunpack.c.l.b16 %v377
  %v470 = vunpack.c.h.b16 %v377
  %v471 = vunpack.c.l.b16 %v378
  %v472 = vunpack.c.h.b16 %v378
  %v473 = vunpack.c.l.b16 %v379
  %v474 = vunpack.c.h.b16 %v379
  %v475 = vunpack.c.l.b16 %v380
  %v476 = vunpack.c.h.b16 %v380
  %v477 = vpack.c.b16 %v417, %v413
  %v478 = vpack.c.b16 %v418, %v414
  %v479 = vpack.c.b16 %v419, %v415
  %v480 = vpack.c.b16 %v420, %v416
  %v481 = vpack.c.b16 %v425, %v421
  %v482 = vpack.c.b16 %v426, %v422
  %v483 = vpack.c.b16 %v427, %v423
  %v484 = vpack.c.b16 %v428, %v424
  %v485 = vpack.c.b16 %v433, %v429
  %v486 = vpack.c.b16 %v434, %v430
  %v487 = vpack.c.b16 %v435, %v431
  %v488 = vpack.c.b16 %v436, %v432
  %v489 = vpack.c.b16 %v441, %v437
  %v490 = vpack.c.b16 %v442, %v438
  %v491 = vpack.c.b16 %v443, %v439
  %v492 = vpack.c.b16 %v444, %v440
  %v493 = vpack.c.b16 %v449, %v445
  %v494 = vpack.c.b16 %v450, %v446
  %v495 = vpack.c.b16 %v451, %v447
  %v496 = vpack.c.b16 %v452, %v448
  %v497 = vpack.c.b16 %v457, %v453
  %v498 = vpack.c.b16 %v458, %v454
  %v499 = vpack.c.b16 %v459, %v455
  %v500 = vpack.c.b16 %v460, %v456
  %v501 = vpack.c.b16 %v465, %v461
  %v502 = vpack.c.b16 %v466, %v462
  %v503 = vpack.c.b16 %v467, %v463
  %v504 = vpack.c.b16 %v468, %v464
  %v505 = vpack.c.b16 %v473, %v469
  %v506 = vpack.c.b16 %v474, %v470
  %v507 = vpack.c.b16 %v475, %v471
  %v508 = vpack.c.b16 %v476, %v472
  %541 = vmatprep.subr.bf16.mxu0 %v478
  %542 = vmatpush1.bf16.msra.mxu0 %v477
  %543 = vmatprep.subr.bf16.mxu0 %v482
  %544 = vmatpush1.bf16.msra.mxu0 %v481
  %545 = vmatprep.subr.bf16.mxu0 %v486
  %546 = vmatpush1.bf16.msra.mxu0 %v485
  %547 = vmatprep.subr.bf16.mxu0 %v490
  %548 = vmatpush1.bf16.msra.mxu0 %v489
  %549 = vmatprep.subr.bf16.mxu0 %v494
  %550 = vmatpush1.bf16.msra.mxu0 %v493
  %551 = vmatprep.subr.bf16.mxu0 %v498
  %552 = vmatpush1.bf16.msra.mxu0 %v497
  %553 = vmatprep.subr.bf16.mxu0 %v502
  %554 = vmatpush1.bf16.msra.mxu0 %v501
  %555 = vmatprep.subr.bf16.mxu0 %v506
  %556 = vmatpush1.bf16.msra.mxu0 %v505
  %557 = vmatprep.subr.bf16.mxu0 0
  %558 = vmatpush1.bf16.msra.mxu0 0
  %559 = vmatprep.subr.bf16.mxu0 0
  %560 = vmatpush1.bf16.msra.mxu0 0
  %561 = vmatprep.subr.bf16.mxu0 0
  %562 = vmatpush1.bf16.msra.mxu0 0
  %563 = vmatprep.subr.bf16.mxu0 0
  %564 = vmatpush1.bf16.msra.mxu0 0
  %565 = vmatprep.subr.bf16.mxu0 0
  %566 = vmatpush1.bf16.msra.mxu0 0
  %567 = vmatprep.subr.bf16.mxu0 0
  %568 = vmatpush1.bf16.msra.mxu0 0
  %569 = vmatprep.subr.bf16.mxu0 0
  %570 = vmatpush1.bf16.msra.mxu0 0
  %571 = vmatprep.subr.bf16.mxu0 0
  %572 = vmatpush1.bf16.msra.mxu0 0
  %573 = vmatprep.mubr.bf16.mxu0 0
  %574 = vmatmul.mubr.bf16.gmra.mrb[0].mxu0 0
  %v575 = vpop.f32.mrb[0].mxu0
  %v576 = vadd.f32 0.0, %v575
  %v577 = vpop.f32.mrb[0].mxu0
  %v578 = vadd.f32 0.0, %v577
  %v579 = vpop.f32.mrb[0].mxu0
  %v580 = vpop.f32.mrb[0].mxu0
  %581 = vdwg.mxu0
  %582 = vmatprep.subr.bf16.mxu0 %v480
  %583 = vmatpush1.bf16.msra.mxu0 %v479
  %584 = vmatprep.subr.bf16.mxu0 %v484
  %585 = vmatpush1.bf16.msra.mxu0 %v483
  %586 = vmatprep.subr.bf16.mxu0 %v488
  %587 = vmatpush1.bf16.msra.mxu0 %v487
  %588 = vmatprep.subr.bf16.mxu0 %v492
  %589 = vmatpush1.bf16.msra.mxu0 %v491
  %590 = vmatprep.subr.bf16.mxu0 %v496
  %591 = vmatpush1.bf16.msra.mxu0 %v495
  %592 = vmatprep.subr.bf16.mxu0 %v500
  %593 = vmatpush1.bf16.msra.mxu0 %v499
  %594 = vmatprep.subr.bf16.mxu0 %v504
  %595 = vmatpush1.bf16.msra.mxu0 %v503
  %596 = vmatprep.subr.bf16.mxu0 %v508
  %597 = vmatpush1.bf16.msra.mxu0 %v507
  %598 = vmatprep.subr.bf16.mxu0 0
  %599 = vmatpush1.bf16.msra.mxu0 0
  %600 = vmatprep.subr.bf16.mxu0 0
  %601 = vmatpush1.bf16.msra.mxu0 0
  %602 = vmatprep.subr.bf16.mxu0 0
  %603 = vmatpush1.bf16.msra.mxu0 0
  %604 = vmatprep.subr.bf16.mxu0 0
  %605 = vmatpush1.bf16.msra.mxu0 0
  %606 = vmatprep.subr.bf16.mxu0 0
  %607 = vmatpush1.bf16.msra.mxu0 0
  %608 = vmatprep.subr.bf16.mxu0 0
  %609 = vmatpush1.bf16.msra.mxu0 0
  %610 = vmatprep.subr.bf16.mxu0 0
  %611 = vmatpush1.bf16.msra.mxu0 0
  %612 = vmatprep.subr.bf16.mxu0 0
  %613 = vmatpush1.bf16.msra.mxu0 0
  %614 = vmatprep.mubr.bf16.mxu0 0
  %615 = vmatmul.mubr.bf16.gmra.mrb[0].mxu0 0
  %v616 = vpop.f32.mrb[0].mxu0
  %v617 = vadd.f32 0.0, %v616
  %v618 = vpop.f32.mrb[0].mxu0
  %v619 = vadd.f32 0.0, %v618
  %v620 = vpop.f32.mrb[0].mxu0
  %v621 = vpop.f32.mrb[0].mxu0
  %622 = vdwg.mxu0
  %v623 = vadd.f32 %v345, %v576
  %v624 = vadd.f32 %v346, %v578
  %v625 = vadd.f32 %v347, %v617
  %v626 = vadd.f32 %v348, %v619
  %v627 = vxor.u32 %v623, 2147483648
  %v628 = vmul.f32 %v627, 1.442695
  %v629 = vpow.pop %v628
  %v630 = vadd.f32 %v629, 1.0
  %v631 = vrcp.pop %v630
  %v632 = vmul.f32 1.0, %v631
  %v633 = vxor.u32 %v624, 2147483648
  %v634 = vmul.f32 %v633, 1.442695
  %v635 = vpow.pop %v634
  %v636 = vadd.f32 %v635, 1.0
  %v637 = vrcp.pop %v636
  %v638 = vmul.f32 1.0, %v637
  %v639 = vtanh.pop %v625
  %v640 = vxor.u32 %v626, 2147483648
  %v641 = vmul.f32 %v640, 1.442695
  %v642 = vpow.pop %v641
  %v643 = vadd.f32 %v642, 1.0
  %v644 = vrcp.pop %v643
  %v645 = vmul.f32 1.0, %v644
  %v646 = vmul.f32 %v638, 0.0
  %v647 = vmul.f32 %v632, %v639
  %v648 = vadd.f32 %v646, %v647
  %v649 = vtanh.pop %v648
  %v650 = vmul.f32 %v645, %v649
  %v651 = vld [vmem:[#allocation2 + $0x20] sm:$0xff]
  %v652 = vld [vmem:[#allocation2 + $0x28] sm:$0xff]
  %v653 = vld [vmem:[#allocation2 + $0x30] sm:$0xff]
  %v654 = vld [vmem:[#allocation2 + $0x38] sm:$0xff]
  %v655 = vpack.c.bf16 %v650, %v650
  %656 = vmatprep.subr.bf16.mxu0 %v478
  %657 = vmatpush1.bf16.msra.mxu0 %v477
  %658 = vmatprep.subr.bf16.mxu0 %v482
  %659 = vmatpush1.bf16.msra.mxu0 %v481
  %660 = vmatprep.subr.bf16.mxu0 %v486
  %661 = vmatpush1.bf16.msra.mxu0 %v485
  %662 = vmatprep.subr.bf16.mxu0 %v490
  %663 = vmatpush1.bf16.msra.mxu0 %v489
  %664 = vmatprep.subr.bf16.mxu0 %v494
  %665 = vmatpush1.bf16.msra.mxu0 %v493
  %666 = vmatprep.subr.bf16.mxu0 %v498
  %667 = vmatpush1.bf16.msra.mxu0 %v497
  %668 = vmatprep.subr.bf16.mxu0 %v502
  %669 = vmatpush1.bf16.msra.mxu0 %v501
  %670 = vmatprep.subr.bf16.mxu0 %v506
  %671 = vmatpush1.bf16.msra.mxu0 %v505
  %672 = vmatprep.subr.bf16.mxu0 0
  %673 = vmatpush1.bf16.msra.mxu0 0
  %674 = vmatprep.subr.bf16.mxu0 0
  %675 = vmatpush1.bf16.msra.mxu0 0
  %676 = vmatprep.subr.bf16.mxu0 0
  %677 = vmatpush1.bf16.msra.mxu0 0
  %678 = vmatprep.subr.bf16.mxu0 0
  %679 = vmatpush1.bf16.msra.mxu0 0
  %680 = vmatprep.subr.bf16.mxu0 0
  %681 = vmatpush1.bf16.msra.mxu0 0
  %682 = vmatprep.subr.bf16.mxu0 0
  %683 = vmatpush1.bf16.msra.mxu0 0
  %684 = vmatprep.subr.bf16.mxu0 0
  %685 = vmatpush1.bf16.msra.mxu0 0
  %686 = vmatprep.subr.bf16.mxu0 0
  %687 = vmatpush1.bf16.msra.mxu0 0
  %688 = vmatprep.mubr.bf16.mxu0 0
  %689 = vmatmul.mubr.bf16.gmra.mrb[0].mxu0 %v655
  %v690 = vpop.f32.mrb[0].mxu0
  %v691 = vadd.f32 0.0, %v690
  %v692 = vpop.f32.mrb[0].mxu0
  %v693 = vadd.f32 0.0, %v692
  %v694 = vpop.f32.mrb[0].mxu0
  %v695 = vpop.f32.mrb[0].mxu0
  %696 = vdwg.mxu0
  %697 = vmatprep.subr.bf16.mxu0 %v480
  %698 = vmatpush1.bf16.msra.mxu0 %v479
  %699 = vmatprep.subr.bf16.mxu0 %v484
  %700 = vmatpush1.bf16.msra.mxu0 %v483
  %701 = vmatprep.subr.bf16.mxu0 %v488
  %702 = vmatpush1.bf16.msra.mxu0 %v487
  %703 = vmatprep.subr.bf16.mxu0 %v492
  %704 = vmatpush1.bf16.msra.mxu0 %v491
  %705 = vmatprep.subr.bf16.mxu0 %v496
  %706 = vmatpush1.bf16.msra.mxu0 %v495
  %707 = vmatprep.subr.bf16.mxu0 %v500
  %708 = vmatpush1.bf16.msra.mxu0 %v499
  %709 = vmatprep.subr.bf16.mxu0 %v504
  %710 = vmatpush1.bf16.msra.mxu0 %v503
  %711 = vmatprep.subr.bf16.mxu0 %v508
  %712 = vmatpush1.bf16.msra.mxu0 %v507
  %713 = vmatprep.subr.bf16.mxu0 0
  %714 = vmatpush1.bf16.msra.mxu0 0
  %715 = vmatprep.subr.bf16.mxu0 0
  %716 = vmatpush1.bf16.msra.mxu0 0
  %717 = vmatprep.subr.bf16.mxu0 0
  %718 = vmatpush1.bf16.msra.mxu0 0
  %719 = vmatprep.subr.bf16.mxu0 0
  %720 = vmatpush1.bf16.msra.mxu0 0
  %721 = vmatprep.subr.bf16.mxu0 0
  %722 = vmatpush1.bf16.msra.mxu0 0
  %723 = vmatprep.subr.bf16.mxu0 0
  %724 = vmatpush1.bf16.msra.mxu0 0
  %725 = vmatprep.subr.bf16.mxu0 0
  %726 = vmatpush1.bf16.msra.mxu0 0
  %727 = vmatprep.subr.bf16.mxu0 0
  %728 = vmatpush1.bf16.msra.mxu0 0
  %729 = vmatprep.mubr.bf16.mxu0 0
  %730 = vmatmul.mubr.bf16.gmra.mrb[0].mxu0 %v655
  %v731 = vpop.f32.mrb[0].mxu0
  %v732 = vadd.f32 0.0, %v731
  %v733 = vpop.f32.mrb[0].mxu0
  %v734 = vadd.f32 0.0, %v733
  %v735 = vpop.f32.mrb[0].mxu0
  %v736 = vpop.f32.mrb[0].mxu0
  %737 = vdwg.mxu0
  %v738 = vadd.f32 %v651, %v691
  %v739 = vadd.f32 %v652, %v693
  %v740 = vadd.f32 %v653, %v732
  %v741 = vadd.f32 %v654, %v734
  %v742 = vxor.u32 %v738, 2147483648
  %v743 = vmul.f32 %v742, 1.442695
  %v744 = vpow.pop %v743
  %v745 = vadd.f32 %v744, 1.0
  %v746 = vrcp.pop %v745
  %v747 = vmul.f32 1.0, %v746
  %v748 = vxor.u32 %v739, 2147483648
  %v749 = vmul.f32 %v748, 1.442695
  %v750 = vpow.pop %v749
  %v751 = vadd.f32 %v750, 1.0
  %v752 = vrcp.pop %v751
  %v753 = vmul.f32 1.0, %v752
  %v754 = vtanh.pop %v740
  %v755 = vxor.u32 %v741, 2147483648
  %v756 = vmul.f32 %v755, 1.442695
  %v757 = vpow.pop %v756
  %v758 = vadd.f32 %v757, 1.0
  %v759 = vrcp.pop %v758
  %v760 = vmul.f32 1.0, %v759
  %v761 = vmul.f32 %v753, %v648
  %v762 = vmul.f32 %v747, %v754
  %v763 = vadd.f32 %v761, %v762
  %v764 = vtanh.pop %v763
  %v765 = vmul.f32 %v760, %v764
  %v766 = vld [vmem:[#allocation2 + $0x40] sm:$0xff]
  %v767 = vld [vmem:[#allocation2 + $0x48] sm:$0xff]
  %v768 = vld [vmem:[#allocation2 + $0x50] sm:$0xff]
  %v769 = vld [vmem:[#allocation2 + $0x58] sm:$0xff]
  %v770 = vpack.c.bf16 %v765, %v765
  %771 = vmatprep.subr.bf16.mxu0 %v478
  %772 = vmatpush1.bf16.msra.mxu0 %v477
  %773 = vmatprep.subr.bf16.mxu0 %v482
  %774 = vmatpush1.bf16.msra.mxu0 %v481
  %775 = vmatprep.subr.bf16.mxu0 %v486
  %776 = vmatpush1.bf16.msra.mxu0 %v485
  %777 = vmatprep.subr.bf16.mxu0 %v490
  %778 = vmatpush1.bf16.msra.mxu0 %v489
  %779 = vmatprep.subr.bf16.mxu0 %v494
  %780 = vmatpush1.bf16.msra.mxu0 %v493
  %781 = vmatprep.subr.bf16.mxu0 %v498
  %782 = vmatpush1.bf16.msra.mxu0 %v497
  %783 = vmatprep.subr.bf16.mxu0 %v502
  %784 = vmatpush1.bf16.msra.mxu0 %v501
  %785 = vmatprep.subr.bf16.mxu0 %v506
  %786 = vmatpush1.bf16.msra.mxu0 %v505
  %787 = vmatprep.subr.bf16.mxu0 0
  %788 = vmatpush1.bf16.msra.mxu0 0
  %789 = vmatprep.subr.bf16.mxu0 0
  %790 = vmatpush1.bf16.msra.mxu0 0
  %791 = vmatprep.subr.bf16.mxu0 0
  %792 = vmatpush1.bf16.msra.mxu0 0
  %793 = vmatprep.subr.bf16.mxu0 0
  %794 = vmatpush1.bf16.msra.mxu0 0
  %795 = vmatprep.subr.bf16.mxu0 0
  %796 = vmatpush1.bf16.msra.mxu0 0
  %797 = vmatprep.subr.bf16.mxu0 0
  %798 = vmatpush1.bf16.msra.mxu0 0
  %799 = vmatprep.subr.bf16.mxu0 0
  %800 = vmatpush1.bf16.msra.mxu0 0
  %801 = vmatprep.subr.bf16.mxu0 0
  %802 = vmatpush1.bf16.msra.mxu0 0
  %803 = vmatprep.mubr.bf16.mxu0 0
  %804 = vmatmul.mubr.bf16.gmra.mrb[0].mxu0 %v770
  %v805 = vpop.f32.mrb[0].mxu0
  %v806 = vadd.f32 0.0, %v805
  %v807 = vpop.f32.mrb[0].mxu0
  %v808 = vadd.f32 0.0, %v807
  %v809 = vpop.f32.mrb[0].mxu0
  %v810 = vpop.f32.mrb[0].mxu0
  %811 = vdwg.mxu0
  %812 = vmatprep.subr.bf16.mxu0 %v480
  %813 = vmatpush1.bf16.msra.mxu0 %v479
  %814 = vmatprep.subr.bf16.mxu0 %v484
  %815 = vmatpush1.bf16.msra.mxu0 %v483
  %816 = vmatprep.subr.bf16.mxu0 %v488
  %817 = vmatpush1.bf16.msra.mxu0 %v487
  %818 = vmatprep.subr.bf16.mxu0 %v492
  %819 = vmatpush1.bf16.msra.mxu0 %v491
  %820 = vmatprep.subr.bf16.mxu0 %v496
  %821 = vmatpush1.bf16.msra.mxu0 %v495
  %822 = vmatprep.subr.bf16.mxu0 %v500
  %823 = vmatpush1.bf16.msra.mxu0 %v499
  %824 = vmatprep.subr.bf16.mxu0 %v504
  %825 = vmatpush1.bf16.msra.mxu0 %v503
  %826 = vmatprep.subr.bf16.mxu0 %v508
  %827 = vmatpush1.bf16.msra.mxu0 %v507
  %828 = vmatprep.subr.bf16.mxu0 0
  %829 = vmatpush1.bf16.msra.mxu0 0
  %830 = vmatprep.subr.bf16.mxu0 0
  %831 = vmatpush1.bf16.msra.mxu0 0
  %832 = vmatprep.subr.bf16.mxu0 0
  %833 = vmatpush1.bf16.msra.mxu0 0
  %834 = vmatprep.subr.bf16.mxu0 0
  %835 = vmatpush1.bf16.msra.mxu0 0
  %836 = vmatprep.subr.bf16.mxu0 0
  %837 = vmatpush1.bf16.msra.mxu0 0
  %838 = vmatprep.subr.bf16.mxu0 0
  %839 = vmatpush1.bf16.msra.mxu0 0
  %840 = vmatprep.subr.bf16.mxu0 0
  %841 = vmatpush1.bf16.msra.mxu0 0
  %842 = vmatprep.subr.bf16.mxu0 0
  %843 = vmatpush1.bf16.msra.mxu0 0
  %844 = vmatprep.mubr.bf16.mxu0 0
  %845 = vmatmul.mubr.bf16.gmra.mrb[0].mxu0 %v770
  %v846 = vpop.f32.mrb[0].mxu0
  %v847 = vadd.f32 0.0, %v846
  %v848 = vpop.f32.mrb[0].mxu0
  %v849 = vadd.f32 0.0, %v848
  %v850 = vpop.f32.mrb[0].mxu0
  %v851 = vpop.f32.mrb[0].mxu0
  %852 = vdwg.mxu0
  %v853 = vadd.f32 %v766, %v806
  %v854 = vadd.f32 %v767, %v808
  %v855 = vadd.f32 %v768, %v847
  %v856 = vadd.f32 %v769, %v849
  %v857 = vxor.u32 %v853, 2147483648
  %v858 = vmul.f32 %v857, 1.442695
  %v859 = vpow.pop %v858
  %v860 = vadd.f32 %v859, 1.0
  %v861 = vrcp.pop %v860
  %v862 = vmul.f32 1.0, %v861
  %v863 = vxor.u32 %v854, 2147483648
  %v864 = vmul.f32 %v863, 1.442695
  %v865 = vpow.pop %v864
  %v866 = vadd.f32 %v865, 1.0
  %v867 = vrcp.pop %v866
  %v868 = vmul.f32 1.0, %v867
  %v869 = vtanh.pop %v855
  %v870 = vxor.u32 %v856, 2147483648
  %v871 = vmul.f32 %v870, 1.442695
  %v872 = vpow.pop %v871
  %v873 = vadd.f32 %v872, 1.0
  %v874 = vrcp.pop %v873
  %v875 = vmul.f32 1.0, %v874
  %v876 = vmul.f32 %v868, %v763
  %v877 = vmul.f32 %v862, %v869
  %v878 = vadd.f32 %v876, %v877
  %v879 = vtanh.pop %v878
  %v880 = vmul.f32 %v875, %v879
  %v881 = vld [vmem:[#allocation2 + $0x60] sm:$0xff]
  %v882 = vld [vmem:[#allocation2 + $0x68] sm:$0xff]
  %v883 = vld [vmem:[#allocation2 + $0x70] sm:$0xff]
  %v884 = vld [vmem:[#allocation2 + $0x78] sm:$0xff]
  %v885 = vpack.c.bf16 %v880, %v880
  %886 = vmatprep.subr.bf16.mxu0 %v478
  %887 = vmatpush1.bf16.msra.mxu0 %v477
  %888 = vmatprep.subr.bf16.mxu0 %v482
  %889 = vmatpush1.bf16.msra.mxu0 %v481
  %890 = vmatprep.subr.bf16.mxu0 %v486
  %891 = vmatpush1.bf16.msra.mxu0 %v485
  %892 = vmatprep.subr.bf16.mxu0 %v490
  %893 = vmatpush1.bf16.msra.mxu0 %v489
  %894 = vmatprep.subr.bf16.mxu0 %v494
  %895 = vmatpush1.bf16.msra.mxu0 %v493
  %896 = vmatprep.subr.bf16.mxu0 %v498
  %897 = vmatpush1.bf16.msra.mxu0 %v497
  %898 = vmatprep.subr.bf16.mxu0 %v502
  %899 = vmatpush1.bf16.msra.mxu0 %v501
  %900 = vmatprep.subr.bf16.mxu0 %v506
  %901 = vmatpush1.bf16.msra.mxu0 %v505
  %902 = vmatprep.subr.bf16.mxu0 0
  %903 = vmatpush1.bf16.msra.mxu0 0
  %904 = vmatprep.subr.bf16.mxu0 0
  %905 = vmatpush1.bf16.msra.mxu0 0
  %906 = vmatprep.subr.bf16.mxu0 0
  %907 = vmatpush1.bf16.msra.mxu0 0
  %908 = vmatprep.subr.bf16.mxu0 0
  %909 = vmatpush1.bf16.msra.mxu0 0
  %910 = vmatprep.subr.bf16.mxu0 0
  %911 = vmatpush1.bf16.msra.mxu0 0
  %912 = vmatprep.subr.bf16.mxu0 0
  %913 = vmatpush1.bf16.msra.mxu0 0
  %914 = vmatprep.subr.bf16.mxu0 0
  %915 = vmatpush1.bf16.msra.mxu0 0
  %916 = vmatprep.subr.bf16.mxu0 0
  %917 = vmatpush1.bf16.msra.mxu0 0
  %918 = vmatprep.mubr.bf16.mxu0 0
  %919 = vmatmul.mubr.bf16.gmra.mrb[0].mxu0 %v885
  %v920 = vpop.f32.mrb[0].mxu0
  %v921 = vadd.f32 0.0, %v920
  %v922 = vpop.f32.mrb[0].mxu0
  %v923 = vadd.f32 0.0, %v922
  %v924 = vpop.f32.mrb[0].mxu0
  %v925 = vpop.f32.mrb[0].mxu0
  %926 = vdwg.mxu0
  %927 = vmatprep.subr.bf16.mxu0 %v480
  %928 = vmatpush1.bf16.msra.mxu0 %v479
  %929 = vmatprep.subr.bf16.mxu0 %v484
  %930 = vmatpush1.bf16.msra.mxu0 %v483
  %931 = vmatprep.subr.bf16.mxu0 %v488
  %932 = vmatpush1.bf16.msra.mxu0 %v487
  %933 = vmatprep.subr.bf16.mxu0 %v492
  %934 = vmatpush1.bf16.msra.mxu0 %v491
  %935 = vmatprep.subr.bf16.mxu0 %v496
  %936 = vmatpush1.bf16.msra.mxu0 %v495
  %937 = vmatprep.subr.bf16.mxu0 %v500
  %938 = vmatpush1.bf16.msra.mxu0 %v499
  %939 = vmatprep.subr.bf16.mxu0 %v504
  %940 = vmatpush1.bf16.msra.mxu0 %v503
  %941 = vmatprep.subr.bf16.mxu0 %v508
  %942 = vmatpush1.bf16.msra.mxu0 %v507
  %943 = vmatprep.subr.bf16.mxu0 0
  %944 = vmatpush1.bf16.msra.mxu0 0
  %945 = vmatprep.subr.bf16.mxu0 0
  %946 = vmatpush1.bf16.msra.mxu0 0
  %947 = vmatprep.subr.bf16.mxu0 0
  %948 = vmatpush1.bf16.msra.mxu0 0
  %949 = vmatprep.subr.bf16.mxu0 0
  %950 = vmatpush1.bf16.msra.mxu0 0
  %951 = vmatprep.subr.bf16.mxu0 0
  %952 = vmatpush1.bf16.msra.mxu0 0
  %953 = vmatprep.subr.bf16.mxu0 0
  %954 = vmatpush1.bf16.msra.mxu0 0
  %955 = vmatprep.subr.bf16.mxu0 0
  %956 = vmatpush1.bf16.msra.mxu0 0
  %957 = vmatprep.subr.bf16.mxu0 0
  %958 = vmatpush1.bf16.msra.mxu0 0
  %959 = vmatprep.mubr.bf16.mxu0 0
  %960 = vmatmul.mubr.bf16.gmra.mrb[0].mxu0 %v885
  %v961 = vpop.f32.mrb[0].mxu0
  %v962 = vadd.f32 0.0, %v961
  %v963 = vpop.f32.mrb[0].mxu0
  %v964 = vadd.f32 0.0, %v963
  %v965 = vpop.f32.mrb[0].mxu0
  %v966 = vpop.f32.mrb[0].mxu0
  %967 = vdwg.mxu0
  %v968 = vadd.f32 %v881, %v921
  %v969 = vadd.f32 %v882, %v923
  %v970 = vadd.f32 %v883, %v962
  %v971 = vadd.f32 %v884, %v964
  %v972 = vxor.u32 %v968, 2147483648
  %v973 = vmul.f32 %v972, 1.442695
  %v974 = vpow.pop %v973
  %v975 = vadd.f32 %v974, 1.0
  %v976 = vrcp.pop %v975
  %v977 = vmul.f32 1.0, %v976
  %v978 = vxor.u32 %v969, 2147483648
  %v979 = vmul.f32 %v978, 1.442695
  %v980 = vpow.pop %v979
  %v981 = vadd.f32 %v980, 1.0
  %v982 = vrcp.pop %v981
  %v983 = vmul.f32 1.0, %v982
  %v984 = vtanh.pop %v970
  %v985 = vxor.u32 %v971, 2147483648
  %v986 = vmul.f32 %v985, 1.442695
  %v987 = vpow.pop %v986
  %v988 = vadd.f32 %v987, 1.0
  %v989 = vrcp.pop %v988
  %v990 = vmul.f32 1.0, %v989
  %v991 = vmul.f32 %v983, %v878
  %v992 = vmul.f32 %v977, %v984
  %v993 = vadd.f32 %v991, %v992
  %v994 = vtanh.pop %v993
  %v995 = vmul.f32 %v990, %v994
  %v996 = vld [vmem:[#allocation2 + $0x80] sm:$0xff]
  %v997 = vld [vmem:[#allocation2 + $0x88] sm:$0xff]
  %v998 = vld [vmem:[#allocation2 + $0x90] sm:$0xff]
  %v999 = vld [vmem:[#allocation2 + $0x98] sm:$0xff]
  %v1000 = vpack.c.bf16 %v995, %v995
  %1001 = vmatprep.subr.bf16.mxu0 %v478
  %1002 = vmatpush1.bf16.msra.mxu0 %v477
  %1003 = vmatprep.subr.bf16.mxu0 %v482
  %1004 = vmatpush1.bf16.msra.mxu0 %v481
  %1005 = vmatprep.subr.bf16.mxu0 %v486
  %1006 = vmatpush1.bf16.msra.mxu0 %v485
  %1007 = vmatprep.subr.bf16.mxu0 %v490
  %1008 = vmatpush1.bf16.msra.mxu0 %v489
  %1009 = vmatprep.subr.bf16.mxu0 %v494
  %1010 = vmatpush1.bf16.msra.mxu0 %v493
  %1011 = vmatprep.subr.bf16.mxu0 %v498
  %1012 = vmatpush1.bf16.msra.mxu0 %v497
  %1013 = vmatprep.subr.bf16.mxu0 %v502
  %1014 = vmatpush1.bf16.msra.mxu0 %v501
  %1015 = vmatprep.subr.bf16.mxu0 %v506
  %1016 = vmatpush1.bf16.msra.mxu0 %v505
  %1017 = vmatprep.subr.bf16.mxu0 0
  %1018 = vmatpush1.bf16.msra.mxu0 0
  %1019 = vmatprep.subr.bf16.mxu0 0
  %1020 = vmatpush1.bf16.msra.mxu0 0
  %1021 = vmatprep.subr.bf16.mxu0 0
  %1022 = vmatpush1.bf16.msra.mxu0 0
  %1023 = vmatprep.subr.bf16.mxu0 0
  %1024 = vmatpush1.bf16.msra.mxu0 0
  %1025 = vmatprep.subr.bf16.mxu0 0
  %1026 = vmatpush1.bf16.msra.mxu0 0
  %1027 = vmatprep.subr.bf16.mxu0 0
  %1028 = vmatpush1.bf16.msra.mxu0 0
  %1029 = vmatprep.subr.bf16.mxu0 0
  %1030 = vmatpush1.bf16.msra.mxu0 0
  %1031 = vmatprep.subr.bf16.mxu0 0
  %1032 = vmatpush1.bf16.msra.mxu0 0
  %1033 = vmatprep.mubr.bf16.mxu0 0
  %1034 = vmatmul.mubr.bf16.gmra.mrb[0].mxu0 %v1000
  %v1035 = vpop.f32.mrb[0].mxu0
  %v1036 = vadd.f32 0.0, %v1035
  %v1037 = vpop.f32.mrb[0].mxu0
  %v1038 = vadd.f32 0.0, %v1037
  %v1039 = vpop.f32.mrb[0].mxu0
  %v1040 = vpop.f32.mrb[0].mxu0
  %1041 = vdwg.mxu0
  %1042 = vmatprep.subr.bf16.mxu0 %v480
  %1043 = vmatpush1.bf16.msra.mxu0 %v479
  %1044 = vmatprep.subr.bf16.mxu0 %v484
  %1045 = vmatpush1.bf16.msra.mxu0 %v483
  %1046 = vmatprep.subr.bf16.mxu0 %v488
  %1047 = vmatpush1.bf16.msra.mxu0 %v487
  %1048 = vmatprep.subr.bf16.mxu0 %v492
  %1049 = vmatpush1.bf16.msra.mxu0 %v491
  %1050 = vmatprep.subr.bf16.mxu0 %v496
  %1051 = vmatpush1.bf16.msra.mxu0 %v495
  %1052 = vmatprep.subr.bf16.mxu0 %v500
  %1053 = vmatpush1.bf16.msra.mxu0 %v499
  %1054 = vmatprep.subr.bf16.mxu0 %v504
  %1055 = vmatpush1.bf16.msra.mxu0 %v503
  %1056 = vmatprep.subr.bf16.mxu0 %v508
  %1057 = vmatpush1.bf16.msra.mxu0 %v507
  %1058 = vmatprep.subr.bf16.mxu0 0
  %1059 = vmatpush1.bf16.msra.mxu0 0
  %1060 = vmatprep.subr.bf16.mxu0 0
  %1061 = vmatpush1.bf16.msra.mxu0 0
  %1062 = vmatprep.subr.bf16.mxu0 0
  %1063 = vmatpush1.bf16.msra.mxu0 0
  %1064 = vmatprep.subr.bf16.mxu0 0
  %1065 = vmatpush1.bf16.msra.mxu0 0
  %1066 = vmatprep.subr.bf16.mxu0 0
  %1067 = vmatpush1.bf16.msra.mxu0 0
  %1068 = vmatprep.subr.bf16.mxu0 0
  %1069 = vmatpush1.bf16.msra.mxu0 0
  %1070 = vmatprep.subr.bf16.mxu0 0
  %1071 = vmatpush1.bf16.msra.mxu0 0
  %1072 = vmatprep.subr.bf16.mxu0 0
  %1073 = vmatpush1.bf16.msra.mxu0 0
  %1074 = vmatprep.mubr.bf16.mxu0 0
  %1075 = vmatmul.mubr.bf16.gmra.mrb[0].mxu0 %v1000
  %v1076 = vpop.f32.mrb[0].mxu0
  %v1077 = vadd.f32 0.0, %v1076
  %v1078 = vpop.f32.mrb[0].mxu0
  %v1079 = vadd.f32 0.0, %v1078
  %v1080 = vpop.f32.mrb[0].mxu0
  %v1081 = vpop.f32.mrb[0].mxu0
  %1082 = vdwg.mxu0
  %v1083 = vadd.f32 %v996, %v1036
  %v1084 = vadd.f32 %v997, %v1038
  %v1085 = vadd.f32 %v998, %v1077
  %v1086 = vadd.f32 %v999, %v1079
  %v1087 = vxor.u32 %v1083, 2147483648
  %v1088 = vmul.f32 %v1087, 1.442695
  %v1089 = vpow.pop %v1088
  %v1090 = vadd.f32 %v1089, 1.0
  %v1091 = vrcp.pop %v1090
  %v1092 = vmul.f32 1.0, %v1091
  %v1093 = vxor.u32 %v1084, 2147483648
  %v1094 = vmul.f32 %v1093, 1.442695
  %v1095 = vpow.pop %v1094
  %v1096 = vadd.f32 %v1095, 1.0
  %v1097 = vrcp.pop %v1096
  %v1098 = vmul.f32 1.0, %v1097
  %v1099 = vtanh.pop %v1085
  %v1100 = vxor.u32 %v1086, 2147483648
  %v1101 = vmul.f32 %v1100, 1.442695
  %v1102 = vpow.pop %v1101
  %v1103 = vadd.f32 %v1102, 1.0
  %v1104 = vrcp.pop %v1103
  %v1105 = vmul.f32 1.0, %v1104
  %v1106 = vmul.f32 %v1098, %v993
  %v1107 = vmul.f32 %v1092, %v1099
  %v1108 = vadd.f32 %v1106, %v1107
  %v1109 = vtanh.pop %v1108
  %v1110 = vmul.f32 %v1105, %v1109
  %v1111 = vld [vmem:[#allocation2 + $0xa0] sm:$0xff]
  %v1112 = vld [vmem:[#allocation2 + $0xa8] sm:$0xff]
  %v1113 = vld [vmem:[#allocation2 + $0xb0] sm:$0xff]
  %v1114 = vld [vmem:[#allocation2 + $0xb8] sm:$0xff]
  %v1115 = vpack.c.bf16 %v1110, %v1110
  %1116 = vmatprep.subr.bf16.mxu0 %v478
  %1117 = vmatpush1.bf16.msra.mxu0 %v477
  %1118 = vmatprep.subr.bf16.mxu0 %v482
  %1119 = vmatpush1.bf16.msra.mxu0 %v481
  %1120 = vmatprep.subr.bf16.mxu0 %v486
  %1121 = vmatpush1.bf16.msra.mxu0 %v485
  %1122 = vmatprep.subr.bf16.mxu0 %v490
  %1123 = vmatpush1.bf16.msra.mxu0 %v489
  %1124 = vmatprep.subr.bf16.mxu0 %v494
  %1125 = vmatpush1.bf16.msra.mxu0 %v493
  %1126 = vmatprep.subr.bf16.mxu0 %v498
  %1127 = vmatpush1.bf16.msra.mxu0 %v497
  %1128 = vmatprep.subr.bf16.mxu0 %v502
  %1129 = vmatpush1.bf16.msra.mxu0 %v501
  %1130 = vmatprep.subr.bf16.mxu0 %v506
  %1131 = vmatpush1.bf16.msra.mxu0 %v505
  %1132 = vmatprep.subr.bf16.mxu0 0
  %1133 = vmatpush1.bf16.msra.mxu0 0
  %1134 = vmatprep.subr.bf16.mxu0 0
  %1135 = vmatpush1.bf16.msra.mxu0 0
  %1136 = vmatprep.subr.bf16.mxu0 0
  %1137 = vmatpush1.bf16.msra.mxu0 0
  %1138 = vmatprep.subr.bf16.mxu0 0
  %1139 = vmatpush1.bf16.msra.mxu0 0
  %1140 = vmatprep.subr.bf16.mxu0 0
  %1141 = vmatpush1.bf16.msra.mxu0 0
  %1142 = vmatprep.subr.bf16.mxu0 0
  %1143 = vmatpush1.bf16.msra.mxu0 0
  %1144 = vmatprep.subr.bf16.mxu0 0
  %1145 = vmatpush1.bf16.msra.mxu0 0
  %1146 = vmatprep.subr.bf16.mxu0 0
  %1147 = vmatpush1.bf16.msra.mxu0 0
  %1148 = vmatprep.mubr.bf16.mxu0 0
  %1149 = vmatmul.mubr.bf16.gmra.mrb[0].mxu0 %v1115
  %v1150 = vpop.f32.mrb[0].mxu0
  %v1151 = vadd.f32 0.0, %v1150
  %v1152 = vpop.f32.mrb[0].mxu0
  %v1153 = vadd.f32 0.0, %v1152
  %v1154 = vpop.f32.mrb[0].mxu0
  %v1155 = vpop.f32.mrb[0].mxu0
  %1156 = vdwg.mxu0
  %1157 = vmatprep.subr.bf16.mxu0 %v480
  %1158 = vmatpush1.bf16.msra.mxu0 %v479
  %1159 = vmatprep.subr.bf16.mxu0 %v484
  %1160 = vmatpush1.bf16.msra.mxu0 %v483
  %1161 = vmatprep.subr.bf16.mxu0 %v488
  %1162 = vmatpush1.bf16.msra.mxu0 %v487
  %1163 = vmatprep.subr.bf16.mxu0 %v492
  %1164 = vmatpush1.bf16.msra.mxu0 %v491
  %1165 = vmatprep.subr.bf16.mxu0 %v496
  %1166 = vmatpush1.bf16.msra.mxu0 %v495
  %1167 = vmatprep.subr.bf16.mxu0 %v500
  %1168 = vmatpush1.bf16.msra.mxu0 %v499
  %1169 = vmatprep.subr.bf16.mxu0 %v504
  %1170 = vmatpush1.bf16.msra.mxu0 %v503
  %1171 = vmatprep.subr.bf16.mxu0 %v508
  %1172 = vmatpush1.bf16.msra.mxu0 %v507
  %1173 = vmatprep.subr.bf16.mxu0 0
  %1174 = vmatpush1.bf16.msra.mxu0 0
  %1175 = vmatprep.subr.bf16.mxu0 0
  %1176 = vmatpush1.bf16.msra.mxu0 0
  %1177 = vmatprep.subr.bf16.mxu0 0
  %1178 = vmatpush1.bf16.msra.mxu0 0
  %1179 = vmatprep.subr.bf16.mxu0 0
  %1180 = vmatpush1.bf16.msra.mxu0 0
  %1181 = vmatprep.subr.bf16.mxu0 0
  %1182 = vmatpush1.bf16.msra.mxu0 0
  %1183 = vmatprep.subr.bf16.mxu0 0
  %1184 = vmatpush1.bf16.msra.mxu0 0
  %1185 = vmatprep.subr.bf16.mxu0 0
  %1186 = vmatpush1.bf16.msra.mxu0 0
  %1187 = vmatprep.subr.bf16.mxu0 0
  %1188 = vmatpush1.bf16.msra.mxu0 0
  %1189 = vmatprep.mubr.bf16.mxu0 0
  %1190 = vmatmul.mubr.bf16.gmra.mrb[0].mxu0 %v1115
  %v1191 = vpop.f32.mrb[0].mxu0
  %v1192 = vadd.f32 0.0, %v1191
  %v1193 = vpop.f32.mrb[0].mxu0
  %v1194 = vadd.f32 0.0, %v1193
  %v1195 = vpop.f32.mrb[0].mxu0
  %v1196 = vpop.f32.mrb[0].mxu0
  %1197 = vdwg.mxu0
  %v1198 = vadd.f32 %v1111, %v1151
  %v1199 = vadd.f32 %v1112, %v1153
  %v1200 = vadd.f32 %v1113, %v1192
  %v1201 = vadd.f32 %v1114, %v1194
  %v1202 = vxor.u32 %v1198, 2147483648
  %v1203 = vmul.f32 %v1202, 1.442695
  %v1204 = vpow.pop %v1203
  %v1205 = vadd.f32 %v1204, 1.0
  %v1206 = vrcp.pop %v1205
  %v1207 = vmul.f32 1.0, %v1206
  %v1208 = vxor.u32 %v1199, 2147483648
  %v1209 = vmul.f32 %v1208, 1.442695
  %v1210 = vpow.pop %v1209
  %v1211 = vadd.f32 %v1210, 1.0
  %v1212 = vrcp.pop %v1211
  %v1213 = vmul.f32 1.0, %v1212
  %v1214 = vtanh.pop %v1200
  %v1215 = vxor.u32 %v1201, 2147483648
  %v1216 = vmul.f32 %v1215, 1.442695
  %v1217 = vpow.pop %v1216
  %v1218 = vadd.f32 %v1217, 1.0
  %v1219 = vrcp.pop %v1218
  %v1220 = vmul.f32 1.0, %v1219
  %v1221 = vmul.f32 %v1213, %v1108
  %v1222 = vmul.f32 %v1207, %v1214
  %v1223 = vadd.f32 %v1221, %v1222
  %v1224 = vtanh.pop %v1223
  %v1225 = vmul.f32 %v1220, %v1224
  %v1226 = vld [vmem:[#allocation2 + $0xc0] sm:$0xff]
  %v1227 = vld [vmem:[#allocation2 + $0xc8] sm:$0xff]
  %v1228 = vld [vmem:[#allocation2 + $0xd0] sm:$0xff]
  %v1229 = vld [vmem:[#allocation2 + $0xd8] sm:$0xff]
  %v1230 = vpack.c.bf16 %v1225, %v1225
  %1231 = vmatprep.subr.bf16.mxu0 %v478
  %1232 = vmatpush1.bf16.msra.mxu0 %v477
  %1233 = vmatprep.subr.bf16.mxu0 %v482
  %1234 = vmatpush1.bf16.msra.mxu0 %v481
  %1235 = vmatprep.subr.bf16.mxu0 %v486
  %1236 = vmatpush1.bf16.msra.mxu0 %v485
  %1237 = vmatprep.subr.bf16.mxu0 %v490
  %1238 = vmatpush1.bf16.msra.mxu0 %v489
  %1239 = vmatprep.subr.bf16.mxu0 %v494
  %1240 = vmatpush1.bf16.msra.mxu0 %v493
  %1241 = vmatprep.subr.bf16.mxu0 %v498
  %1242 = vmatpush1.bf16.msra.mxu0 %v497
  %1243 = vmatprep.subr.bf16.mxu0 %v502
  %1244 = vmatpush1.bf16.msra.mxu0 %v501
  %1245 = vmatprep.subr.bf16.mxu0 %v506
  %1246 = vmatpush1.bf16.msra.mxu0 %v505
  %1247 = vmatprep.subr.bf16.mxu0 0
  %1248 = vmatpush1.bf16.msra.mxu0 0
  %1249 = vmatprep.subr.bf16.mxu0 0
  %1250 = vmatpush1.bf16.msra.mxu0 0
  %1251 = vmatprep.subr.bf16.mxu0 0
  %1252 = vmatpush1.bf16.msra.mxu0 0
  %1253 = vmatprep.subr.bf16.mxu0 0
  %1254 = vmatpush1.bf16.msra.mxu0 0
  %1255 = vmatprep.subr.bf16.mxu0 0
  %1256 = vmatpush1.bf16.msra.mxu0 0
  %1257 = vmatprep.subr.bf16.mxu0 0
  %1258 = vmatpush1.bf16.msra.mxu0 0
  %1259 = vmatprep.subr.bf16.mxu0 0
  %1260 = vmatpush1.bf16.msra.mxu0 0
  %1261 = vmatprep.subr.bf16.mxu0 0
  %1262 = vmatpush1.bf16.msra.mxu0 0
  %1263 = vmatprep.mubr.bf16.mxu0 0
  %1264 = vmatmul.mubr.bf16.gmra.mrb[0].mxu0 %v1230
  %v1265 = vpop.f32.mrb[0].mxu0
  %v1266 = vadd.f32 0.0, %v1265
  %v1267 = vpop.f32.mrb[0].mxu0
  %v1268 = vadd.f32 0.0, %v1267
  %v1269 = vpop.f32.mrb[0].mxu0
  %v1270 = vpop.f32.mrb[0].mxu0
  %1271 = vdwg.mxu0
  %1272 = vmatprep.subr.bf16.mxu0 %v480
  %1273 = vmatpush1.bf16.msra.mxu0 %v479
  %1274 = vmatprep.subr.bf16.mxu0 %v484
  %1275 = vmatpush1.bf16.msra.mxu0 %v483
  %1276 = vmatprep.subr.bf16.mxu0 %v488
  %1277 = vmatpush1.bf16.msra.mxu0 %v487
  %1278 = vmatprep.subr.bf16.mxu0 %v492
  %1279 = vmatpush1.bf16.msra.mxu0 %v491
  %1280 = vmatprep.subr.bf16.mxu0 %v496
  %1281 = vmatpush1.bf16.msra.mxu0 %v495
  %1282 = vmatprep.subr.bf16.mxu0 %v500
  %1283 = vmatpush1.bf16.msra.mxu0 %v499
  %1284 = vmatprep.subr.bf16.mxu0 %v504
  %1285 = vmatpush1.bf16.msra.mxu0 %v503
  %1286 = vmatprep.subr.bf16.mxu0 %v508
  %1287 = vmatpush1.bf16.msra.mxu0 %v507
  %1288 = vmatprep.subr.bf16.mxu0 0
  %1289 = vmatpush1.bf16.msra.mxu0 0
  %1290 = vmatprep.subr.bf16.mxu0 0
  %1291 = vmatpush1.bf16.msra.mxu0 0
  %1292 = vmatprep.subr.bf16.mxu0 0
  %1293 = vmatpush1.bf16.msra.mxu0 0
  %1294 = vmatprep.subr.bf16.mxu0 0
  %1295 = vmatpush1.bf16.msra.mxu0 0
  %1296 = vmatprep.subr.bf16.mxu0 0
  %1297 = vmatpush1.bf16.msra.mxu0 0
  %1298 = vmatprep.subr.bf16.mxu0 0
  %1299 = vmatpush1.bf16.msra.mxu0 0
  %1300 = vmatprep.subr.bf16.mxu0 0
  %1301 = vmatpush1.bf16.msra.mxu0 0
  %1302 = vmatprep.subr.bf16.mxu0 0
  %1303 = vmatpush1.bf16.msra.mxu0 0
  %1304 = vmatprep.mubr.bf16.mxu0 0
  %1305 = vmatmul.mubr.bf16.gmra.mrb[0].mxu0 %v1230
  %v1306 = vpop.f32.mrb[0].mxu0
  %v1307 = vadd.f32 0.0, %v1306
  %v1308 = vpop.f32.mrb[0].mxu0
  %v1309 = vadd.f32 0.0, %v1308
  %v1310 = vpop.f32.mrb[0].mxu0
  %v1311 = vpop.f32.mrb[0].mxu0
  %1312 = vdwg.mxu0
  %v1313 = vadd.f32 %v1226, %v1266
  %v1314 = vadd.f32 %v1227, %v1268
  %v1315 = vadd.f32 %v1228, %v1307
  %v1316 = vadd.f32 %v1229, %v1309
  %v1317 = vxor.u32 %v1313, 2147483648
  %v1318 = vmul.f32 %v1317, 1.442695
  %v1319 = vpow.pop %v1318
  %v1320 = vadd.f32 %v1319, 1.0
  %v1321 = vrcp.pop %v1320
  %v1322 = vmul.f32 1.0, %v1321
  %v1323 = vxor.u32 %v1314, 2147483648
  %v1324 = vmul.f32 %v1323, 1.442695
  %v1325 = vpow.pop %v1324
  %v1326 = vadd.f32 %v1325, 1.0
  %v1327 = vrcp.pop %v1326
  %v1328 = vmul.f32 1.0, %v1327
  %v1329 = vtanh.pop %v1315
  %v1330 = vxor.u32 %v1316, 2147483648
  %v1331 = vmul.f32 %v1330, 1.442695
  %v1332 = vpow.pop %v1331
  %v1333 = vadd.f32 %v1332, 1.0
  %v1334 = vrcp.pop %v1333
  %v1335 = vmul.f32 1.0, %v1334
  %v1336 = vmul.f32 %v1328, %v1223
  %v1337 = vmul.f32 %v1322, %v1329
  %v1338 = vadd.f32 %v1336, %v1337
  %v1339 = vtanh.pop %v1338
  %v1340 = vmul.f32 %v1335, %v1339
  %v1341 = vld [vmem:[#allocation2 + $0xe0] sm:$0xff]
  %v1342 = vld [vmem:[#allocation2 + $0xe8] sm:$0xff]
  %v1343 = vld [vmem:[#allocation2 + $0xf0] sm:$0xff]
  %v1344 = vld [vmem:[#allocation2 + $0xf8] sm:$0xff]
  %v1345 = vpack.c.bf16 %v1340, %v1340
  %1346 = vmatprep.subr.bf16.mxu0 %v478
  %1347 = vmatpush1.bf16.msra.mxu0 %v477
  %1348 = vmatprep.subr.bf16.mxu0 %v482
  %1349 = vmatpush1.bf16.msra.mxu0 %v481
  %1350 = vmatprep.subr.bf16.mxu0 %v486
  %1351 = vmatpush1.bf16.msra.mxu0 %v485
  %1352 = vmatprep.subr.bf16.mxu0 %v490
  %1353 = vmatpush1.bf16.msra.mxu0 %v489
  %1354 = vmatprep.subr.bf16.mxu0 %v494
  %1355 = vmatpush1.bf16.msra.mxu0 %v493
  %1356 = vmatprep.subr.bf16.mxu0 %v498
  %1357 = vmatpush1.bf16.msra.mxu0 %v497
  %1358 = vmatprep.subr.bf16.mxu0 %v502
  %1359 = vmatpush1.bf16.msra.mxu0 %v501
  %1360 = vmatprep.subr.bf16.mxu0 %v506
  %1361 = vmatpush1.bf16.msra.mxu0 %v505
  %1362 = vmatprep.subr.bf16.mxu0 0
  %1363 = vmatpush1.bf16.msra.mxu0 0
  %1364 = vmatprep.subr.bf16.mxu0 0
  %1365 = vmatpush1.bf16.msra.mxu0 0
  %1366 = vmatprep.subr.bf16.mxu0 0
  %1367 = vmatpush1.bf16.msra.mxu0 0
  %1368 = vmatprep.subr.bf16.mxu0 0
  %1369 = vmatpush1.bf16.msra.mxu0 0
  %1370 = vmatprep.subr.bf16.mxu0 0
  %1371 = vmatpush1.bf16.msra.mxu0 0
  %1372 = vmatprep.subr.bf16.mxu0 0
  %1373 = vmatpush1.bf16.msra.mxu0 0
  %1374 = vmatprep.subr.bf16.mxu0 0
  %1375 = vmatpush1.bf16.msra.mxu0 0
  %1376 = vmatprep.subr.bf16.mxu0 0
  %1377 = vmatpush1.bf16.msra.mxu0 0
  %1378 = vmatprep.mubr.bf16.mxu0 0
  %1379 = vmatmul.mubr.bf16.gmra.mrb[0].mxu0 %v1345
  %v1380 = vpop.f32.mrb[0].mxu0
  %v1381 = vadd.f32 0.0, %v1380
  %v1382 = vpop.f32.mrb[0].mxu0
  %v1383 = vadd.f32 0.0, %v1382
  %v1384 = vpop.f32.mrb[0].mxu0
  %v1385 = vpop.f32.mrb[0].mxu0
  %1386 = vdwg.mxu0
  %1387 = vmatprep.subr.bf16.mxu0 %v480
  %1388 = vmatpush1.bf16.msra.mxu0 %v479
  %1389 = vmatprep.subr.bf16.mxu0 %v484
  %1390 = vmatpush1.bf16.msra.mxu0 %v483
  %1391 = vmatprep.subr.bf16.mxu0 %v488
  %1392 = vmatpush1.bf16.msra.mxu0 %v487
  %1393 = vmatprep.subr.bf16.mxu0 %v492
  %1394 = vmatpush1.bf16.msra.mxu0 %v491
  %1395 = vmatprep.subr.bf16.mxu0 %v496
  %1396 = vmatpush1.bf16.msra.mxu0 %v495
  %1397 = vmatprep.subr.bf16.mxu0 %v500
  %1398 = vmatpush1.bf16.msra.mxu0 %v499
  %1399 = vmatprep.subr.bf16.mxu0 %v504
  %1400 = vmatpush1.bf16.msra.mxu0 %v503
  %1401 = vmatprep.subr.bf16.mxu0 %v508
  %1402 = vmatpush1.bf16.msra.mxu0 %v507
  %1403 = vmatprep.subr.bf16.mxu0 0
  %1404 = vmatpush1.bf16.msra.mxu0 0
  %1405 = vmatprep.subr.bf16.mxu0 0
  %1406 = vmatpush1.bf16.msra.mxu0 0
  %1407 = vmatprep.subr.bf16.mxu0 0
  %1408 = vmatpush1.bf16.msra.mxu0 0
  %1409 = vmatprep.subr.bf16.mxu0 0
  %1410 = vmatpush1.bf16.msra.mxu0 0
  %1411 = vmatprep.subr.bf16.mxu0 0
  %1412 = vmatpush1.bf16.msra.mxu0 0
  %1413 = vmatprep.subr.bf16.mxu0 0
  %1414 = vmatpush1.bf16.msra.mxu0 0
  %1415 = vmatprep.subr.bf16.mxu0 0
  %1416 = vmatpush1.bf16.msra.mxu0 0
  %1417 = vmatprep.subr.bf16.mxu0 0
  %1418 = vmatpush1.bf16.msra.mxu0 0
  %1419 = vmatprep.mubr.bf16.mxu0 0
  %1420 = vmatmul.mubr.bf16.gmra.mrb[0].mxu0 %v1345
  %v1421 = vpop.f32.mrb[0].mxu0
  %v1422 = vadd.f32 0.0, %v1421
  %v1423 = vpop.f32.mrb[0].mxu0
  %v1424 = vadd.f32 0.0, %v1423
  %v1425 = vpop.f32.mrb[0].mxu0
  %v1426 = vpop.f32.mrb[0].mxu0
  %1427 = vdwg.mxu0
  %v1428 = vadd.f32 %v1341, %v1381
  %v1429 = vadd.f32 %v1342, %v1383
  %v1430 = vadd.f32 %v1343, %v1422
  %v1431 = vadd.f32 %v1344, %v1424
  %v1432 = vxor.u32 %v1428, 2147483648
  %v1433 = vmul.f32 %v1432, 1.442695
  %v1434 = vpow.pop %v1433
  %v1435 = vadd.f32 %v1434, 1.0
  %v1436 = vrcp.pop %v1435
  %v1437 = vmul.f32 1.0, %v1436
  %v1438 = vxor.u32 %v1429, 2147483648
  %v1439 = vmul.f32 %v1438, 1.442695
  %v1440 = vpow.pop %v1439
  %v1441 = vadd.f32 %v1440, 1.0
  %v1442 = vrcp.pop %v1441
  %v1443 = vmul.f32 1.0, %v1442
  %v1444 = vtanh.pop %v1430
  %v1445 = vxor.u32 %v1431, 2147483648
  %v1446 = vmul.f32 %v1445, 1.442695
  %v1447 = vpow.pop %v1446
  %v1448 = vadd.f32 %v1447, 1.0
  %v1449 = vrcp.pop %v1448
  %v1450 = vmul.f32 1.0, %v1449
  %v1451 = vmul.f32 %v1443, %v1338
  %v1452 = vmul.f32 %v1437, %v1444
  %v1453 = vadd.f32 %v1451, %v1452
  %v1454 = vtanh.pop %v1453
  %v1455 = vmul.f32 %v1450, %v1454
  %v1456 = vpack.c.bf16 %v1455, %v1455
  %v1457 = vld [vmem:[%s4] sm:$0xff]
  %v1458 = vld [vmem:[%s4 + $0x8] sm:$0xff]
  %v1459 = vld [vmem:[%s4 + $0x10] sm:$0xff]
  %v1460 = vld [vmem:[%s4 + $0x18] sm:$0xff]
  %v1461 = vld [vmem:[%s4 + $0x20] sm:$0xff]
  %v1462 = vld [vmem:[%s4 + $0x28] sm:$0xff]
  %v1463 = vld [vmem:[%s4 + $0x30] sm:$0xff]
  %v1464 = vld [vmem:[%s4 + $0x38] sm:$0xff]
  %v1465 = vld [vmem:[%s4 + $0x40] sm:$0xff]
  %v1466 = vld [vmem:[%s4 + $0x48] sm:$0xff]
  %v1467 = vld [vmem:[%s4 + $0x50] sm:$0xff]
  %v1468 = vld [vmem:[%s4 + $0x58] sm:$0xff]
  %v1469 = vld [vmem:[%s4 + $0x60] sm:$0xff]
  %v1470 = vld [vmem:[%s4 + $0x68] sm:$0xff]
  %v1471 = vld [vmem:[%s4 + $0x70] sm:$0xff]
  %v1472 = vld [vmem:[%s4 + $0x78] sm:$0xff]
  %v1473 = vld [vmem:[%s4 + $0x80] sm:$0xff]
  %v1474 = vld [vmem:[%s4 + $0x88] sm:$0xff]
  %v1475 = vld [vmem:[%s4 + $0x90] sm:$0xff]
  %v1476 = vld [vmem:[%s4 + $0x98] sm:$0xff]
  %v1477 = vld [vmem:[%s4 + $0xa0] sm:$0xff]
  %v1478 = vld [vmem:[%s4 + $0xa8] sm:$0xff]
  %v1479 = vld [vmem:[%s4 + $0xb0] sm:$0xff]
  %v1480 = vld [vmem:[%s4 + $0xb8] sm:$0xff]
  %v1481 = vld [vmem:[%s4 + $0xc0] sm:$0xff]
  %v1482 = vld [vmem:[%s4 + $0xc8] sm:$0xff]
  %v1483 = vld [vmem:[%s4 + $0xd0] sm:$0xff]
  %v1484 = vld [vmem:[%s4 + $0xd8] sm:$0xff]
  %v1485 = vld [vmem:[%s4 + $0xe0] sm:$0xff]
  %v1486 = vld [vmem:[%s4 + $0xe8] sm:$0xff]
  %v1487 = vld [vmem:[%s4 + $0xf0] sm:$0xff]
  %v1488 = vld [vmem:[%s4 + $0xf8] sm:$0xff]
  %v1489 = vld [vmem:[%s5] sm:$0xf]
  %v1491 = vlaneseq
  %v1492 = vshrl.u32 %v1491, 7
  %v1493 = vsub.s32 0, %v1492
  %v1494 = vrot.slane %v1489, %v1493
  %v1495 = vlaneseq
  %v1496 = vshrl.u32 %v1495, 7
  %v1497 = vsub.s32 1, %v1496
  %v1498 = vrot.slane %v1489, %v1497
  %v1499 = vlaneseq
  %v1500 = vshrl.u32 %v1499, 7
  %v1501 = vsub.s32 2, %v1500
  %v1502 = vrot.slane %v1489, %v1501
  %v1503 = vlaneseq
  %v1504 = vshrl.u32 %v1503, 7
  %v1505 = vsub.s32 3, %v1504
  %v1506 = vrot.slane %v1489, %v1505
  %v1543 = vunpack.c.l.b16 %v1457
  %v1544 = vunpack.c.h.b16 %v1457
  %v1545 = vunpack.c.l.b16 %v1458
  %v1546 = vunpack.c.h.b16 %v1458
  %v1547 = vunpack.c.l.b16 %v1459
  %v1548 = vunpack.c.h.b16 %v1459
  %v1549 = vunpack.c.l.b16 %v1460
  %v1550 = vunpack.c.h.b16 %v1460
  %v1551 = vunpack.c.l.b16 %v1461
  %v1552 = vunpack.c.h.b16 %v1461
  %v1553 = vunpack.c.l.b16 %v1462
  %v1554 = vunpack.c.h.b16 %v1462
  %v1555 = vunpack.c.l.b16 %v1463
  %v1556 = vunpack.c.h.b16 %v1463
  %v1557 = vunpack.c.l.b16 %v1464
  %v1558 = vunpack.c.h.b16 %v1464
  %v1559 = vunpack.c.l.b16 %v1465
  %v1560 = vunpack.c.h.b16 %v1465
  %v1561 = vunpack.c.l.b16 %v1466
  %v1562 = vunpack.c.h.b16 %v1466
  %v1563 = vunpack.c.l.b16 %v1467
  %v1564 = vunpack.c.h.b16 %v1467
  %v1565 = vunpack.c.l.b16 %v1468
  %v1566 = vunpack.c.h.b16 %v1468
  %v1567 = vunpack.c.l.b16 %v1469
  %v1568 = vunpack.c.h.b16 %v1469
  %v1569 = vunpack.c.l.b16 %v1470
  %v1570 = vunpack.c.h.b16 %v1470
  %v1571 = vunpack.c.l.b16 %v1471
  %v1572 = vunpack.c.h.b16 %v1471
  %v1573 = vunpack.c.l.b16 %v1472
  %v1574 = vunpack.c.h.b16 %v1472
  %v1575 = vunpack.c.l.b16 %v1473
  %v1576 = vunpack.c.h.b16 %v1473
  %v1577 = vunpack.c.l.b16 %v1474
  %v1578 = vunpack.c.h.b16 %v1474
  %v1579 = vunpack.c.l.b16 %v1475
  %v1580 = vunpack.c.h.b16 %v1475
  %v1581 = vunpack.c.l.b16 %v1476
  %v1582 = vunpack.c.h.b16 %v1476
  %v1583 = vunpack.c.l.b16 %v1477
  %v1584 = vunpack.c.h.b16 %v1477
  %v1585 = vunpack.c.l.b16 %v1478
  %v1586 = vunpack.c.h.b16 %v1478
  %v1587 = vunpack.c.l.b16 %v1479
  %v1588 = vunpack.c.h.b16 %v1479
  %v1589 = vunpack.c.l.b16 %v1480
  %v1590 = vunpack.c.h.b16 %v1480
  %v1591 = vunpack.c.l.b16 %v1481
  %v1592 = vunpack.c.h.b16 %v1481
  %v1593 = vunpack.c.l.b16 %v1482
  %v1594 = vunpack.c.h.b16 %v1482
  %v1595 = vunpack.c.l.b16 %v1483
  %v1596 = vunpack.c.h.b16 %v1483
  %v1597 = vunpack.c.l.b16 %v1484
  %v1598 = vunpack.c.h.b16 %v1484
  %v1599 = vunpack.c.l.b16 %v1485
  %v1600 = vunpack.c.h.b16 %v1485
  %v1601 = vunpack.c.l.b16 %v1486
  %v1602 = vunpack.c.h.b16 %v1486
  %v1603 = vunpack.c.l.b16 %v1487
  %v1604 = vunpack.c.h.b16 %v1487
  %v1605 = vunpack.c.l.b16 %v1488
  %v1606 = vunpack.c.h.b16 %v1488
  %v1607 = vpack.c.b16 %v1547, %v1543
  %v1608 = vpack.c.b16 %v1548, %v1544
  %v1609 = vpack.c.b16 %v1549, %v1545
  %v1610 = vpack.c.b16 %v1550, %v1546
  %v1611 = vpack.c.b16 %v1555, %v1551
  %v1612 = vpack.c.b16 %v1556, %v1552
  %v1613 = vpack.c.b16 %v1557, %v1553
  %v1614 = vpack.c.b16 %v1558, %v1554
  %v1615 = vpack.c.b16 %v1563, %v1559
  %v1616 = vpack.c.b16 %v1564, %v1560
  %v1617 = vpack.c.b16 %v1565, %v1561
  %v1618 = vpack.c.b16 %v1566, %v1562
  %v1619 = vpack.c.b16 %v1571, %v1567
  %v1620 = vpack.c.b16 %v1572, %v1568
  %v1621 = vpack.c.b16 %v1573, %v1569
  %v1622 = vpack.c.b16 %v1574, %v1570
  %v1623 = vpack.c.b16 %v1579, %v1575
  %v1624 = vpack.c.b16 %v1580, %v1576
  %v1625 = vpack.c.b16 %v1581, %v1577
  %v1626 = vpack.c.b16 %v1582, %v1578
  %v1627 = vpack.c.b16 %v1587, %v1583
  %v1628 = vpack.c.b16 %v1588, %v1584
  %v1629 = vpack.c.b16 %v1589, %v1585
  %v1630 = vpack.c.b16 %v1590, %v1586
  %v1631 = vpack.c.b16 %v1595, %v1591
  %v1632 = vpack.c.b16 %v1596, %v1592
  %v1633 = vpack.c.b16 %v1597, %v1593
  %v1634 = vpack.c.b16 %v1598, %v1594
  %v1635 = vpack.c.b16 %v1603, %v1599
  %v1636 = vpack.c.b16 %v1604, %v1600
  %v1637 = vpack.c.b16 %v1605, %v1601
  %v1638 = vpack.c.b16 %v1606, %v1602
  %1671 = vmatprep.subr.bf16.mxu0 %v1608
  %1672 = vmatpush1.bf16.msra.mxu0 %v1607
  %1673 = vmatprep.subr.bf16.mxu0 %v1612
  %1674 = vmatpush1.bf16.msra.mxu0 %v1611
  %1675 = vmatprep.subr.bf16.mxu0 %v1616
  %1676 = vmatpush1.bf16.msra.mxu0 %v1615
  %1677 = vmatprep.subr.bf16.mxu0 %v1620
  %1678 = vmatpush1.bf16.msra.mxu0 %v1619
  %1679 = vmatprep.subr.bf16.mxu0 %v1624
  %1680 = vmatpush1.bf16.msra.mxu0 %v1623
  %1681 = vmatprep.subr.bf16.mxu0 %v1628
  %1682 = vmatpush1.bf16.msra.mxu0 %v1627
  %1683 = vmatprep.subr.bf16.mxu0 %v1632
  %1684 = vmatpush1.bf16.msra.mxu0 %v1631
  %1685 = vmatprep.subr.bf16.mxu0 %v1636
  %1686 = vmatpush1.bf16.msra.mxu0 %v1635
  %1687 = vmatprep.subr.bf16.mxu0 0
  %1688 = vmatpush1.bf16.msra.mxu0 0
  %1689 = vmatprep.subr.bf16.mxu0 0
  %1690 = vmatpush1.bf16.msra.mxu0 0
  %1691 = vmatprep.subr.bf16.mxu0 0
  %1692 = vmatpush1.bf16.msra.mxu0 0
  %1693 = vmatprep.subr.bf16.mxu0 0
  %1694 = vmatpush1.bf16.msra.mxu0 0
  %1695 = vmatprep.subr.bf16.mxu0 0
  %1696 = vmatpush1.bf16.msra.mxu0 0
  %1697 = vmatprep.subr.bf16.mxu0 0
  %1698 = vmatpush1.bf16.msra.mxu0 0
  %1699 = vmatprep.subr.bf16.mxu0 0
  %1700 = vmatpush1.bf16.msra.mxu0 0
  %1701 = vmatprep.subr.bf16.mxu0 0
  %1702 = vmatpush1.bf16.msra.mxu0 0
  %1703 = vmatprep.mubr.bf16.mxu0 0
  %1704 = vmatmul.mubr.bf16.gmra.mrb[0].mxu0 %v1456
  %v1705 = vpop.f32.mrb[0].mxu0
  %v1706 = vadd.f32 %v1494, %v1705
  %v1707 = vpop.f32.mrb[0].mxu0
  %v1708 = vadd.f32 %v1498, %v1707
  %v1709 = vpop.f32.mrb[0].mxu0
  %v1710 = vpop.f32.mrb[0].mxu0
  %1711 = vdwg.mxu0
  %1712 = vmatprep.subr.bf16.mxu0 %v1610
  %1713 = vmatpush1.bf16.msra.mxu0 %v1609
  %1714 = vmatprep.subr.bf16.mxu0 %v1614
  %1715 = vmatpush1.bf16.msra.mxu0 %v1613
  %1716 = vmatprep.subr.bf16.mxu0 %v1618
  %1717 = vmatpush1.bf16.msra.mxu0 %v1617
  %1718 = vmatprep.subr.bf16.mxu0 %v1622
  %1719 = vmatpush1.bf16.msra.mxu0 %v1621
  %1720 = vmatprep.subr.bf16.mxu0 %v1626
  %1721 = vmatpush1.bf16.msra.mxu0 %v1625
  %1722 = vmatprep.subr.bf16.mxu0 %v1630
  %1723 = vmatpush1.bf16.msra.mxu0 %v1629
  %1724 = vmatprep.subr.bf16.mxu0 %v1634
  %1725 = vmatpush1.bf16.msra.mxu0 %v1633
  %1726 = vmatprep.subr.bf16.mxu0 %v1638
  %1727 = vmatpush1.bf16.msra.mxu0 %v1637
  %1728 = vmatprep.subr.bf16.mxu0 0
  %1729 = vmatpush1.bf16.msra.mxu0 0
  %1730 = vmatprep.subr.bf16.mxu0 0
  %1731 = vmatpush1.bf16.msra.mxu0 0
  %1732 = vmatprep.subr.bf16.mxu0 0
  %1733 = vmatpush1.bf16.msra.mxu0 0
  %1734 = vmatprep.subr.bf16.mxu0 0
  %1735 = vmatpush1.bf16.msra.mxu0 0
  %1736 = vmatprep.subr.bf16.mxu0 0
  %1737 = vmatpush1.bf16.msra.mxu0 0
  %1738 = vmatprep.subr.bf16.mxu0 0
  %1739 = vmatpush1.bf16.msra.mxu0 0
  %1740 = vmatprep.subr.bf16.mxu0 0
  %1741 = vmatpush1.bf16.msra.mxu0 0
  %1742 = vmatprep.subr.bf16.mxu0 0
  %1743 = vmatpush1.bf16.msra.mxu0 0
  %1744 = vmatprep.mubr.bf16.mxu0 0
  %1745 = vmatmul.mubr.bf16.gmra.mrb[0].mxu0 %v1456
  %v1746 = vpop.f32.mrb[0].mxu0
  %v1747 = vadd.f32 %v1502, %v1746
  %v1748 = vpop.f32.mrb[0].mxu0
  %v1749 = vadd.f32 %v1506, %v1748
  %v1750 = vpop.f32.mrb[0].mxu0
  %v1751 = vpop.f32.mrb[0].mxu0
  %1752 = vdwg.mxu0
  %1753 = vst [vmem:[%s6] sm:$0xff] %v1706
  %1754 = vst [vmem:[%s6 + $0x8] sm:$0xff] %v1708
  %1755 = vst [vmem:[%s6 + $0x10] sm:$0xff] %v1747
  %1756 = vst [vmem:[%s6 + $0x18] sm:$0xff] %v1749
  // Predicated region
  $region26: #{chord_predictor_forward.1} parent=0 // pred_check
    _
  $region27: #{chord_predictor_forward.1} parent=0 // pred_check_branch
    %1758 = sbr.rel (0) target = $region29
  $region28: #{chord_predictor_forward.1} parent=0 // pred_region
    _
  $region29: #{chord_predictor_forward.1} parent=0 // pred_fallthru
    _
  // Predicated region
  $region30: #{chord_predictor_forward.1} parent=0 // pred_check
    _
  $region31: #{chord_predictor_forward.1} parent=0 // pred_check_branch
    %1760 = sbr.rel (0) target = $region33
  $region32: #{chord_predictor_forward.1} parent=0 // pred_region
    _
  $region33: #{chord_predictor_forward.1} parent=0 // pred_fallthru
    _

</llo_original>
